<compile_context>
chip_gen: v6e
topology: v6e:2x2x1
jax: 0.10.0
libtpu: 0.0.40
codegen_flags: <defaults>
</compile_context>

<pallas_src>
import functools

import jax
import jax.numpy as jnp
from jax import lax
from jax.experimental import pallas as pl
from jax.experimental.pallas import tpu as pltpu

# ---------------- config (small, consistent with the module) ----------------
B = 2          # batch
S = 16         # sequence length
H = 32         # hidden_dim
P = 64         # pff_dim
H2 = H // 2
NH = 4         # n_heads
HD = H // NH   # head dim
PAD_ID = 0.0   # config.pad_id (constant pad value in F.pad; must be 0 for weight pre-pad)
LANES = 128


# ---------------- host-side weight packing ----------------
def _pack_params(entries):
    """Pack named 2-D f32 arrays (rows, cols<=128) into one (R, 128) buffer.

    Each entry's starting row is aligned to a multiple of 8 (sublane tile) so all
    in-kernel static slices are sublane-aligned. Returns (buffer, meta) where
    meta[name] = (row_offset, rows, cols)."""
    meta = {}
    blocks = []
    off = 0
    for name, a in entries:
        a = jnp.asarray(a, jnp.float32)
        r, c = a.shape
        meta[name] = (off, r, c)
        a = jnp.pad(a, ((0, (-r) % 8), (0, LANES - c)))
        blocks.append(a)
        off += a.shape[0]
    return jnp.concatenate(blocks, axis=0), meta


# ---------------- the Pallas kernel (one batch element per grid step) ----------------
def encoder_cell_kernel(meta, x_ref, mask_ref, w_ref, out_ref):
    def W(name):
        off, r, c = meta[name]
        return w_ref[off:off + r, :c]

    def layer_norm(v, gname, bname, eps=1e-5):
        g, b = W(gname), W(bname)                       # (1, C)
        mu = jnp.mean(v, axis=-1, keepdims=True)
        vc = v - mu
        var = jnp.mean(vc * vc, axis=-1, keepdims=True)
        return vc * lax.rsqrt(var + eps) * g + b

    x = x_ref[0].astype(jnp.float32)                    # (S, H)
    pad_mask = mask_ref[0]                              # (1, S); 1.0 where key is padded

    # hoisted once: row index for conv boundary masks
    row_idx = lax.broadcasted_iota(jnp.int32, (S, 1), 0)

    def shifted(arr, d):
        # y[t] = arr[t + d], zero outside [0, S).  Roll runs on the XLU slot;
        # boundary handling is a single VPU select against a hoisted iota.
        if d == 0:
            return arr
        y = pltpu.roll(arr, (-d) % S, axis=0)
        valid = (row_idx < (S - d)) if d > 0 else (row_idx >= (-d))
        return jnp.where(valid, y, 0.0)

    def conv_seq(xin, wname, bname, ktaps, pad):
        # 1-D conv over seq. Packed weight layout: rows = ktaps*Cin, cols = Cout.
        off, _, cout = meta[wname]
        cin = xin.shape[1]
        acc = jnp.zeros((xin.shape[0], cout), jnp.float32)
        for k in range(ktaps):
            wk = w_ref[off + k * cin: off + (k + 1) * cin, :cout]
            acc = acc + jnp.dot(shifted(xin, k - pad), wk,
                                preferred_element_type=jnp.float32)
        return acc + W(bname)

    def dwconv_seq(xin, wname, bname, ktaps, pad):
        w = W(wname)                                    # (ktaps, C)
        acc = jnp.zeros_like(xin)
        for k in range(ktaps):
            acc = acc + shifted(xin, k - pad) * w[k:k + 1, :]
        return acc + W(bname)

    # ---- block 1: B01 = GLU(LN0(x)); out & gate fused into one 2H-wide conv pass ----
    xn0 = layer_norm(x, "ln0_g", "ln0_b")
    glu = conv_seq(xn0, "glu_w", "glu_b", ktaps=3, pad=1)              # (S, 2H)
    b01 = glu[:, :H] * jax.nn.sigmoid(glu[:, H:])                      # (S, H)

    # ---- block 2: left (Linear+ReLU) + right (Conv1d+ReLU); right_w pre-padded to P ----
    b02n = layer_norm(b01, "ln1_g", "ln1_b")
    left = jax.nn.relu(
        jnp.dot(b02n, W("left_w"), preferred_element_type=jnp.float32) + W("left_b"))
    right = jax.nn.relu(conv_seq(b02n, "right_w", "right_b", ktaps=3, pad=1))
    b02 = left + right                                                  # (S, P)

    # ---- block 3: separable conv (pw_w pre-padded to H) + B01 residual ----
    b03n = layer_norm(b02, "lnm_g", "lnm_b")
    sc = dwconv_seq(b03n, "dw_w", "dw_b", ktaps=9, pad=4)               # (S, P)
    sc = jnp.dot(sc, W("pw_w"), preferred_element_type=jnp.float32) + W("pw_b")
    b03 = sc + b01                                                      # (S, H)

    # ---- block 4: MHA with key padding mask (fused QKV, heads batched along sublanes) ----
    b04n = layer_norm(b03, "ln2_g", "ln2_b")
    qkv = jnp.dot(b04n, W("wqkv"), preferred_element_type=jnp.float32) + W("bqkv")  # (S,3H)
    q, k, v = qkv[:, :H], qkv[:, H:2 * H], qkv[:, 2 * H:]
    hmask = W("head_mask")                                              # (NH, H), precomputed
    mask_bias = jnp.where(pad_mask > 0.5, -1e30, 0.0)                   # (1, S) additive bias
    scale = 1.0 / (HD ** 0.5)

    # stack head-masked queries along sublanes -> one score matmul + one softmax pass
    q_heads = jnp.concatenate([q * hmask[h:h + 1, :] for h in range(NH)], axis=0)  # (NH*S, H)
    s_all = lax.dot_general(q_heads, k, (((1,), (1,)), ((), ())),
                            preferred_element_type=jnp.float32) * scale            # (NH*S, S)
    s_all = s_all + mask_bias
    s_all = s_all - jnp.max(s_all, axis=-1, keepdims=True)
    p = jnp.exp(s_all)
    p = p * pl.reciprocal(jnp.sum(p, axis=-1, keepdims=True), approx=True)
    a_all = jnp.dot(p, v, preferred_element_type=jnp.float32)           # (NH*S, H)
    attn = jnp.zeros((S, H), jnp.float32)
    for h in range(NH):
        attn = attn + a_all[h * S:(h + 1) * S, :] * hmask[h:h + 1, :]
    attn_out = jnp.dot(attn, W("wo"), preferred_element_type=jnp.float32) + W("bo")
    b04 = b04n + attn_out      # residual on LN2(B03), exactly as in the PyTorch forward

    # ---- output block: pff (Linear -> SiLU -> Linear) + residual ----
    outn = layer_norm(b04, "ln3_g", "ln3_b")
    h1 = jnp.dot(outn, W("pff1_w"), preferred_element_type=jnp.float32) + W("pff1_b")
    h1 = h1 * jax.nn.sigmoid(h1)
    h2 = jnp.dot(h1, W("pff2_w"), preferred_element_type=jnp.float32) + W("pff2_b")
    out_ref[0] = (h2 + b04).astype(out_ref.dtype)


# ---------------- wrapper ----------------
def build_encoder_cell(meta, nrows):
    kernel = functools.partial(encoder_cell_kernel, meta)

    @jax.jit
    def run(x, e_mask_bool, wbuf):
        b, s, h = x.shape
        mask_f = e_mask_bool.astype(jnp.float32).reshape(b, 1, s)
        return pl.pallas_call(
            kernel,
            out_shape=jax.ShapeDtypeStruct((b, s, h), jnp.float32),
            grid=(b,),
            in_specs=[
                pl.BlockSpec((1, s, h), lambda i: (i, 0, 0)),     # x: one batch row per step
                pl.BlockSpec((1, 1, s), lambda i: (i, 0, 0)),     # key padding mask
                pl.BlockSpec((nrows, LANES), lambda i: (0, 0)),   # packed weights (1 DMA)
            ],
            out_specs=pl.BlockSpec((1, s, h), lambda i: (i, 0, 0)),
            compiler_params=pltpu.CompilerParams(
                dimension_semantics=("parallel",)),               # v7x: one batch elem / TC
        )(x, mask_f, wbuf)

    return run


# ---------------- deterministic parameter init (torch layouts) ----------------
def init_torch_params(key):
    ks = iter(jax.random.split(key, 64))

    def nrm(shape, scale=0.1):
        return (scale * jax.random.normal(next(ks), shape)).astype(jnp.float32)

    tp = {}
    for i in range(4):
        tp[f"ln{i}_g"] = 1.0 + nrm((H,))
        tp[f"ln{i}_b"] = nrm((H,))
    tp["lnm_g"] = 1.0 + nrm((P,))
    tp["lnm_b"] = nrm((P,))
    tp["glu_w"] = nrm((2 * H, H, 3))          # GatedConvolution conv
    tp["glu_b"] = nrm((2 * H,))
    tp["left_w"] = nrm((P, H))                # Linear(H -> P)
    tp["left_b"] = nrm((P,))
    tp["right_w"] = nrm((H2, H, 3))           # Conv1d(H -> H/2, k=3, pad=1)
    tp["right_b"] = nrm((H2,))
    tp["dw_w"] = nrm((P, 1, 9))               # depthwise Conv1d(P, P, 9, groups=P, pad=4)
    tp["dw_b"] = nrm((P,))
    tp["pw_w"] = nrm((H2, P, 1))              # pointwise Conv1d(P -> H/2, 1)
    tp["pw_b"] = nrm((H2,))
    tp["in_proj_w"] = nrm((3 * H, H))         # MultiheadAttention
    tp["in_proj_b"] = nrm((3 * H,))
    tp["out_proj_w"] = nrm((H, H))
    tp["out_proj_b"] = nrm((H,))
    tp["pff1_w"] = nrm((P, H))                # Linear(H -> P)
    tp["pff1_b"] = nrm((P,))
    tp["pff2_w"] = nrm((H, P))                # Linear(P -> H)
    tp["pff2_b"] = nrm((H,))
    return tp


def torch_to_packed(tp):
    """Transpose / fuse / pre-pad torch-layout weights and pack into one buffer."""
    entries = []
    add = lambda n, a: entries.append((n, jnp.asarray(a, jnp.float32)))

    for i in range(4):
        add(f"ln{i}_g", tp[f"ln{i}_g"].reshape(1, H))
        add(f"ln{i}_b", tp[f"ln{i}_b"].reshape(1, H))
    add("lnm_g", tp["lnm_g"].reshape(1, P))
    add("lnm_b", tp["lnm_b"].reshape(1, P))

    # fused GLU conv: (2H, H, 3) -> (3, H, 2H) -> (3H, 2H); out = cols[:H], gate = cols[H:]
    gw = jnp.transpose(tp["glu_w"], (2, 1, 0)).reshape(3 * H, 2 * H)
    add("glu_w", gw)
    add("glu_b", tp["glu_b"].reshape(1, 2 * H))

    add("left_w", tp["left_w"].T)                       # (H, P)
    add("left_b", tp["left_b"].reshape(1, P))

    # right conv pre-padded H2 -> P output columns (exact because PAD_ID == 0.0)
    rw = jnp.transpose(tp["right_w"], (2, 1, 0))        # (3, H, H2)
    rw = jnp.pad(rw, ((0, 0), (0, 0), (0, P - H2)))
    add("right_w", rw.reshape(3 * H, P))
    add("right_b", jnp.pad(tp["right_b"], (0, P - H2)).reshape(1, P))

    add("dw_w", jnp.transpose(tp["dw_w"][:, 0, :], (1, 0)))   # (9, P)
    add("dw_b", tp["dw_b"].reshape(1, P))

    # pointwise conv pre-padded H2 -> H output columns (exact because PAD_ID == 0.0)
    pw = jnp.transpose(tp["pw_w"][:, :, 0], (1, 0))     # (P, H2)
    add("pw_w", jnp.pad(pw, ((0, 0), (0, H - H2))))
    add("pw_b", jnp.pad(tp["pw_b"], (0, H - H2)).reshape(1, H))

    # fused QKV projection
    add("wqkv", tp["in_proj_w"].T)                      # (H, 3H)
    add("bqkv", tp["in_proj_b"].reshape(1, 3 * H))
    add("wo", tp["out_proj_w"].T)
    add("bo", tp["out_proj_b"].reshape(1, H))

    add("pff1_w", tp["pff1_w"].T)
    add("pff1_b", tp["pff1_b"].reshape(1, P))
    add("pff2_w", tp["pff2_w"].T)
    add("pff2_b", tp["pff2_b"].reshape(1, H))

    # constant per-head lane masks (NH, H): row h selects columns [h*HD, (h+1)*HD)
    add("head_mask", jnp.repeat(jnp.eye(NH, dtype=jnp.float32), HD, axis=1))

    return _pack_params(entries)


# ---------------- plain-JAX reference (operates on torch-layout weights) ----------------
def reference(x, e_mask, tp):
    def ln(v, g, b):
        mu = v.mean(-1, keepdims=True)
        var = ((v - mu) ** 2).mean(-1, keepdims=True)
        return (v - mu) / jnp.sqrt(var + 1e-5) * g + b

    def conv1d(v, wt, bt, pad):  # v (B,S,Cin), wt (Cout,Cin,K)
        k_taps = wt.shape[2]
        vp = jnp.pad(v, ((0, 0), (pad, pad), (0, 0)))
        y = jnp.zeros((v.shape[0], v.shape[1], wt.shape[0]), jnp.float32)
        for k in range(k_taps):
            y = y + jnp.einsum('bsc,oc->bso', vp[:, k:k + v.shape[1], :], wt[:, :, k])
        return y + bt

    def dwconv1d(v, wt, bt, pad):  # wt (C,1,K)
        k_taps = wt.shape[2]
        vp = jnp.pad(v, ((0, 0), (pad, pad), (0, 0)))
        y = jnp.zeros_like(v)
        for k in range(k_taps):
            y = y + vp[:, k:k + v.shape[1], :] * wt[:, 0, k][None, None, :]
        return y + bt

    xn0 = ln(x, tp["ln0_g"], tp["ln0_b"])
    glu = conv1d(xn0, tp["glu_w"], tp["glu_b"], 1)
    b01 = glu[..., :H] * jax.nn.sigmoid(glu[..., H:])

    b02n = ln(b01, tp["ln1_g"], tp["ln1_b"])
    left = jax.nn.relu(b02n @ tp["left_w"].T + tp["left_b"])
    right = jax.nn.relu(conv1d(b02n, tp["right_w"], tp["right_b"], 1))
    right = jnp.pad(right, ((0, 0), (0, 0), (0, left.shape[-1] - right.shape[-1])),
                    constant_values=PAD_ID)
    b02 = left + right

    b03n = ln(b02, tp["lnm_g"], tp["lnm_b"])
    sc = dwconv1d(b03n, tp["dw_w"], tp["dw_b"], 4)
    sc = jnp.einsum('bsp,op->bso', sc, tp["pw_w"][:, :, 0]) + tp["pw_b"]
    sc = jnp.pad(sc, ((0, 0), (0, 0), (0, H - sc.shape[-1])), constant_values=PAD_ID)
    b03 = sc + b01

    b04n = ln(b03, tp["ln2_g"], tp["ln2_b"])
    wq, wk, wv = jnp.split(tp["in_proj_w"], 3, 0)
    bq, bk, bv = jnp.split(tp["in_proj_b"], 3, 0)
    q = (b04n @ wq.T + bq).reshape(B, S, NH, HD).transpose(0, 2, 1, 3)
    k = (b04n @ wk.T + bk).reshape(B, S, NH, HD).transpose(0, 2, 1, 3)
    v = (b04n @ wv.T + bv).reshape(B, S, NH, HD).transpose(0, 2, 1, 3)
    s = jnp.einsum('bhqd,bhkd->bhqk', q, k) / jnp.sqrt(1.0 * HD)
    s = jnp.where(e_mask[:, None, None, :], -1e30, s)
    p = jax.nn.softmax(s, axis=-1)
    ao = jnp.einsum('bhqk,bhkd->bhqd', p, v).transpose(0, 2, 1, 3).reshape(B, S, H)
    ao = ao @ tp["out_proj_w"].T + tp["out_proj_b"]
    b04 = b04n + ao

    outn = ln(b04, tp["ln3_g"], tp["ln3_b"])
    h1 = outn @ tp["pff1_w"].T + tp["pff1_b"]
    h1 = h1 * jax.nn.sigmoid(h1)
    return h1 @ tp["pff2_w"].T + tp["pff2_b"] + b04


if __name__ == "__main__":
    key = jax.random.PRNGKey(0)
    kx, kp_ = jax.random.split(key)
    x = jax.random.normal(kx, (B, S, H), jnp.float32)

    # key_padding_mask semantics: True = padded (ignored) position
    e_mask = jnp.zeros((B, S), jnp.bool_)
    e_mask = e_mask.at[1, S - 3:].set(True)

    tp = init_torch_params(kp_)
    wbuf, meta = torch_to_packed(tp)

    encoder_cell = build_encoder_cell(meta, wbuf.shape[0])
    out = jax.block_until_ready(encoder_cell(x, e_mask, wbuf))

    ref = reference(x, e_mask, tp)
    max_err = float(jnp.max(jnp.abs(out - ref)))
    assert out.shape == (B, S, H), out.shape
    assert max_err < 5e-2, f"max abs error vs reference: {max_err}"
    print("KERNEL_OK")
</pallas_src>

<mosaic_0001>
module attributes {stable_mosaic.version = 11 : i64} {
  func.func @encoder_cell_kernel(%arg0: i32, %arg1: memref<1x16x32xf32, #tpu.memory_space<vmem>>, %arg2: memref<1x1x16xf32, #tpu.memory_space<vmem>>, %arg3: memref<624x128xf32, #tpu.memory_space<vmem>>, %arg4: memref<1x16x32xf32, #tpu.memory_space<vmem>>) attributes {dimension_semantics = [#tpu.dimension_semantics<parallel>], iteration_bounds = array<i64: 2>, scalar_prefetch = 0 : i64, scratch_operands = 0 : i64, tpu.core_type = #tpu.core_type<tc>, window_params = [{transform_indices = @transform_0, window_bounds = array<i64: 1, 16, 32>}, {transform_indices = @transform_1, window_bounds = array<i64: 1, 1, 16>}, {pipeline_mode = #tpu.pipeline_mode<synchronous>, transform_indices = @transform_2, window_bounds = array<i64: 624, 128>}, {transform_indices = @transform_3, window_bounds = array<i64: 1, 16, 32>}]} {
    %c0 = arith.constant 0 : index
    %c0_0 = arith.constant 0 : index
    %c0_1 = arith.constant 0 : index
    %0 = vector.load %arg1[%c0, %c0_0, %c0_1] : memref<1x16x32xf32, #tpu.memory_space<vmem>>, vector<1x16x32xf32>
    %1 = vector.shape_cast %0 : vector<1x16x32xf32> to vector<16x32xf32>
    %c0_2 = arith.constant 0 : index
    %c0_3 = arith.constant 0 : index
    %c0_4 = arith.constant 0 : index
    %2 = vector.load %arg2[%c0_2, %c0_3, %c0_4] : memref<1x1x16xf32, #tpu.memory_space<vmem>>, vector<1x1x16xf32>
    %3 = vector.shape_cast %2 : vector<1x1x16xf32> to vector<1x16xf32>
    %4 = tpu.iota {dimensions = array<i32: 0>} : vector<16x1xi32>
    %c0_5 = arith.constant 0 : index
    %c0_6 = arith.constant 0 : index
    %5 = vector.load %arg3[%c0_5, %c0_6] : memref<624x128xf32, #tpu.memory_space<vmem>>, vector<1x32xf32>
    %c8 = arith.constant 8 : index
    %c0_7 = arith.constant 0 : index
    %6 = vector.load %arg3[%c8, %c0_7] : memref<624x128xf32, #tpu.memory_space<vmem>>, vector<1x32xf32>
    %cst = arith.constant dense<0.000000e+00> : vector<16xf32>
    %7 = vector.multi_reduction <add>, %1, %cst [1] : vector<16x32xf32> to vector<16xf32>
    %8 = vector.shape_cast %7 : vector<16xf32> to vector<16x1xf32>
    %cst_8 = arith.constant 3.200000e+01 : f32
    %9 = vector.broadcast %cst_8 : f32 to vector<16x1xf32>
    %10 = arith.divf %8, %9 : vector<16x1xf32>
    %11 = vector.broadcast %10 : vector<16x1xf32> to vector<16x32xf32>
    %12 = arith.subf %1, %11 : vector<16x32xf32>
    %13 = arith.mulf %12, %12 : vector<16x32xf32>
    %cst_9 = arith.constant dense<0.000000e+00> : vector<16xf32>
    %14 = vector.multi_reduction <add>, %13, %cst_9 [1] : vector<16x32xf32> to vector<16xf32>
    %15 = vector.shape_cast %14 : vector<16xf32> to vector<16x1xf32>
    %cst_10 = arith.constant 3.200000e+01 : f32
    %16 = vector.broadcast %cst_10 : f32 to vector<16x1xf32>
    %17 = arith.divf %15, %16 : vector<16x1xf32>
    %cst_11 = arith.constant 9.99999974E-6 : f32
    %18 = vector.broadcast %cst_11 : f32 to vector<16x1xf32>
    %19 = arith.addf %17, %18 : vector<16x1xf32>
    %20 = math.rsqrt %19 : vector<16x1xf32>
    %21 = vector.broadcast %20 : vector<16x1xf32> to vector<16x32xf32>
    %22 = arith.mulf %12, %21 : vector<16x32xf32>
    %23 = vector.broadcast %5 : vector<1x32xf32> to vector<16x32xf32>
    %24 = arith.mulf %22, %23 : vector<16x32xf32>
    %25 = vector.broadcast %6 : vector<1x32xf32> to vector<16x32xf32>
    %26 = arith.addf %24, %25 : vector<16x32xf32>
    %cst_12 = arith.constant 0.000000e+00 : f32
    %27 = vector.broadcast %cst_12 : f32 to vector<16x64xf32>
    %c80 = arith.constant 80 : index
    %c0_13 = arith.constant 0 : index
    %28 = vector.load %arg3[%c80, %c0_13] : memref<624x128xf32, #tpu.memory_space<vmem>>, vector<32x64xf32>
    %c1_i32 = arith.constant 1 : i32
    %29 = tpu.dynamic_rotate %26 by %c1_i32 dim 0 : vector<16x32xf32>, i32 -> vector<16x32xf32>
    %c1_i32_14 = arith.constant 1 : i32
    %30 = vector.broadcast %c1_i32_14 : i32 to vector<16x1xi32>
    %31 = arith.cmpi sge, %4, %30 : vector<16x1xi32>
    %cst_15 = arith.constant 0.000000e+00 : f32
    %32 = vector.shape_cast %31 : vector<16x1xi1> to vector<16x1xi1>
    %33 = vector.broadcast %32 : vector<16x1xi1> to vector<16x32xi1>
    %34 = vector.broadcast %cst_15 : f32 to vector<16x32xf32>
    %35 = arith.select %33, %29, %34 : vector<16x32xi1>, vector<16x32xf32>
    %cst_16 = arith.constant dense<0.000000e+00> : vector<16x64xf32>
    %36 = tpu.matmul %35, %28, %cst_16 {dimension_numbers = #tpu.dot_dimension_numbers<[1], [0], [0], [1], [0, 0, 1, 1], [], []>} : vector<16x32xf32>, vector<32x64xf32>, vector<16x64xf32> -> vector<16x64xf32>
    %37 = arith.addf %27, %36 : vector<16x64xf32>
    %c112 = arith.constant 112 : index
    %c0_17 = arith.constant 0 : index
    %38 = vector.load %arg3[%c112, %c0_17] : memref<624x128xf32, #tpu.memory_space<vmem>>, vector<32x64xf32>
    %cst_18 = arith.constant dense<0.000000e+00> : vector<16x64xf32>
    %39 = tpu.matmul %26, %38, %cst_18 {dimension_numbers = #tpu.dot_dimension_numbers<[1], [0], [0], [1], [0, 0, 1, 1], [], []>} : vector<16x32xf32>, vector<32x64xf32>, vector<16x64xf32> -> vector<16x64xf32>
    %40 = arith.addf %37, %39 : vector<16x64xf32>
    %c144 = arith.constant 144 : index
    %c0_19 = arith.constant 0 : index
    %41 = vector.load %arg3[%c144, %c0_19] : memref<624x128xf32, #tpu.memory_space<vmem>>, vector<32x64xf32>
    %c15_i32 = arith.constant 15 : i32
    %42 = tpu.dynamic_rotate %26 by %c15_i32 dim 0 : vector<16x32xf32>, i32 -> vector<16x32xf32>
    %c15_i32_20 = arith.constant 15 : i32
    %43 = vector.broadcast %c15_i32_20 : i32 to vector<16x1xi32>
    %44 = arith.cmpi slt, %4, %43 : vector<16x1xi32>
    %cst_21 = arith.constant 0.000000e+00 : f32
    %45 = vector.shape_cast %44 : vector<16x1xi1> to vector<16x1xi1>
    %46 = vector.broadcast %45 : vector<16x1xi1> to vector<16x32xi1>
    %47 = vector.broadcast %cst_21 : f32 to vector<16x32xf32>
    %48 = arith.select %46, %42, %47 : vector<16x32xi1>, vector<16x32xf32>
    %cst_22 = arith.constant dense<0.000000e+00> : vector<16x64xf32>
    %49 = tpu.matmul %48, %41, %cst_22 {dimension_numbers = #tpu.dot_dimension_numbers<[1], [0], [0], [1], [0, 0, 1, 1], [], []>} : vector<16x32xf32>, vector<32x64xf32>, vector<16x64xf32> -> vector<16x64xf32>
    %50 = arith.addf %40, %49 : vector<16x64xf32>
    %c176 = arith.constant 176 : index
    %c0_23 = arith.constant 0 : index
    %51 = vector.load %arg3[%c176, %c0_23] : memref<624x128xf32, #tpu.memory_space<vmem>>, vector<1x64xf32>
    %52 = vector.broadcast %51 : vector<1x64xf32> to vector<16x64xf32>
    %53 = arith.addf %50, %52 : vector<16x64xf32>
    %54 = vector.extract_strided_slice %53 {offsets = [0, 0], sizes = [16, 32], strides = [1, 1]} : vector<16x64xf32> to vector<16x32xf32>
    %55 = vector.extract_strided_slice %53 {offsets = [0, 32], sizes = [16, 32], strides = [1, 1]} : vector<16x64xf32> to vector<16x32xf32>
    %56 = arith.negf %55 : vector<16x32xf32>
    %57 = math.exp %56 : vector<16x32xf32>
    %cst_24 = arith.constant 1.000000e+00 : f32
    %58 = vector.broadcast %cst_24 : f32 to vector<16x32xf32>
    %59 = arith.addf %58, %57 : vector<16x32xf32>
    %60 = arith.divf %58, %59 : vector<16x32xf32>
    %61 = arith.mulf %54, %60 : vector<16x32xf32>
    %c16 = arith.constant 16 : index
    %c0_25 = arith.constant 0 : index
    %62 = vector.load %arg3[%c16, %c0_25] : memref<624x128xf32, #tpu.memory_space<vmem>>, vector<1x32xf32>
    %c24 = arith.constant 24 : index
    %c0_26 = arith.constant 0 : index
    %63 = vector.load %arg3[%c24, %c0_26] : memref<624x128xf32, #tpu.memory_space<vmem>>, vector<1x32xf32>
    %cst_27 = arith.constant dense<0.000000e+00> : vector<16xf32>
    %64 = vector.multi_reduction <add>, %61, %cst_27 [1] : vector<16x32xf32> to vector<16xf32>
    %65 = vector.shape_cast %64 : vector<16xf32> to vector<16x1xf32>
    %cst_28 = arith.constant 3.200000e+01 : f32
    %66 = vector.broadcast %cst_28 : f32 to vector<16x1xf32>
    %67 = arith.divf %65, %66 : vector<16x1xf32>
    %68 = vector.broadcast %67 : vector<16x1xf32> to vector<16x32xf32>
    %69 = arith.subf %61, %68 : vector<16x32xf32>
    %70 = arith.mulf %69, %69 : vector<16x32xf32>
    %cst_29 = arith.constant dense<0.000000e+00> : vector<16xf32>
    %71 = vector.multi_reduction <add>, %70, %cst_29 [1] : vector<16x32xf32> to vector<16xf32>
    %72 = vector.shape_cast %71 : vector<16xf32> to vector<16x1xf32>
    %cst_30 = arith.constant 3.200000e+01 : f32
    %73 = vector.broadcast %cst_30 : f32 to vector<16x1xf32>
    %74 = arith.divf %72, %73 : vector<16x1xf32>
    %cst_31 = arith.constant 9.99999974E-6 : f32
    %75 = vector.broadcast %cst_31 : f32 to vector<16x1xf32>
    %76 = arith.addf %74, %75 : vector<16x1xf32>
    %77 = math.rsqrt %76 : vector<16x1xf32>
    %78 = vector.broadcast %77 : vector<16x1xf32> to vector<16x32xf32>
    %79 = arith.mulf %69, %78 : vector<16x32xf32>
    %80 = vector.broadcast %62 : vector<1x32xf32> to vector<16x32xf32>
    %81 = arith.mulf %79, %80 : vector<16x32xf32>
    %82 = vector.broadcast %63 : vector<1x32xf32> to vector<16x32xf32>
    %83 = arith.addf %81, %82 : vector<16x32xf32>
    %c184 = arith.constant 184 : index
    %c0_32 = arith.constant 0 : index
    %84 = vector.load %arg3[%c184, %c0_32] : memref<624x128xf32, #tpu.memory_space<vmem>>, vector<32x64xf32>
    %cst_33 = arith.constant dense<0.000000e+00> : vector<16x64xf32>
    %85 = tpu.matmul %83, %84, %cst_33 {dimension_numbers = #tpu.dot_dimension_numbers<[1], [0], [0], [1], [0, 0, 1, 1], [], []>} : vector<16x32xf32>, vector<32x64xf32>, vector<16x64xf32> -> vector<16x64xf32>
    %c216 = arith.constant 216 : index
    %c0_34 = arith.constant 0 : index
    %86 = vector.load %arg3[%c216, %c0_34] : memref<624x128xf32, #tpu.memory_space<vmem>>, vector<1x64xf32>
    %87 = vector.broadcast %86 : vector<1x64xf32> to vector<16x64xf32>
    %88 = arith.addf %85, %87 : vector<16x64xf32>
    %cst_35 = arith.constant 0.000000e+00 : f32
    %89 = vector.broadcast %cst_35 : f32 to vector<16x64xf32>
    %90 = arith.maximumf %88, %89 : vector<16x64xf32>
    %cst_36 = arith.constant 0.000000e+00 : f32
    %91 = vector.broadcast %cst_36 : f32 to vector<16x64xf32>
    %c224 = arith.constant 224 : index
    %c0_37 = arith.constant 0 : index
    %92 = vector.load %arg3[%c224, %c0_37] : memref<624x128xf32, #tpu.memory_space<vmem>>, vector<32x64xf32>
    %c1_i32_38 = arith.constant 1 : i32
    %93 = tpu.dynamic_rotate %83 by %c1_i32_38 dim 0 : vector<16x32xf32>, i32 -> vector<16x32xf32>
    %c1_i32_39 = arith.constant 1 : i32
    %94 = vector.broadcast %c1_i32_39 : i32 to vector<16x1xi32>
    %95 = arith.cmpi sge, %4, %94 : vector<16x1xi32>
    %cst_40 = arith.constant 0.000000e+00 : f32
    %96 = vector.shape_cast %95 : vector<16x1xi1> to vector<16x1xi1>
    %97 = vector.broadcast %96 : vector<16x1xi1> to vector<16x32xi1>
    %98 = vector.broadcast %cst_40 : f32 to vector<16x32xf32>
    %99 = arith.select %97, %93, %98 : vector<16x32xi1>, vector<16x32xf32>
    %cst_41 = arith.constant dense<0.000000e+00> : vector<16x64xf32>
    %100 = tpu.matmul %99, %92, %cst_41 {dimension_numbers = #tpu.dot_dimension_numbers<[1], [0], [0], [1], [0, 0, 1, 1], [], []>} : vector<16x32xf32>, vector<32x64xf32>, vector<16x64xf32> -> vector<16x64xf32>
    %101 = arith.addf %91, %100 : vector<16x64xf32>
    %c256 = arith.constant 256 : index
    %c0_42 = arith.constant 0 : index
    %102 = vector.load %arg3[%c256, %c0_42] : memref<624x128xf32, #tpu.memory_space<vmem>>, vector<32x64xf32>
    %cst_43 = arith.constant dense<0.000000e+00> : vector<16x64xf32>
    %103 = tpu.matmul %83, %102, %cst_43 {dimension_numbers = #tpu.dot_dimension_numbers<[1], [0], [0], [1], [0, 0, 1, 1], [], []>} : vector<16x32xf32>, vector<32x64xf32>, vector<16x64xf32> -> vector<16x64xf32>
    %104 = arith.addf %101, %103 : vector<16x64xf32>
    %c288 = arith.constant 288 : index
    %c0_44 = arith.constant 0 : index
    %105 = vector.load %arg3[%c288, %c0_44] : memref<624x128xf32, #tpu.memory_space<vmem>>, vector<32x64xf32>
    %c15_i32_45 = arith.constant 15 : i32
    %106 = tpu.dynamic_rotate %83 by %c15_i32_45 dim 0 : vector<16x32xf32>, i32 -> vector<16x32xf32>
    %c15_i32_46 = arith.constant 15 : i32
    %107 = vector.broadcast %c15_i32_46 : i32 to vector<16x1xi32>
    %108 = arith.cmpi slt, %4, %107 : vector<16x1xi32>
    %cst_47 = arith.constant 0.000000e+00 : f32
    %109 = vector.shape_cast %108 : vector<16x1xi1> to vector<16x1xi1>
    %110 = vector.broadcast %109 : vector<16x1xi1> to vector<16x32xi1>
    %111 = vector.broadcast %cst_47 : f32 to vector<16x32xf32>
    %112 = arith.select %110, %106, %111 : vector<16x32xi1>, vector<16x32xf32>
    %cst_48 = arith.constant dense<0.000000e+00> : vector<16x64xf32>
    %113 = tpu.matmul %112, %105, %cst_48 {dimension_numbers = #tpu.dot_dimension_numbers<[1], [0], [0], [1], [0, 0, 1, 1], [], []>} : vector<16x32xf32>, vector<32x64xf32>, vector<16x64xf32> -> vector<16x64xf32>
    %114 = arith.addf %104, %113 : vector<16x64xf32>
    %c320 = arith.constant 320 : index
    %c0_49 = arith.constant 0 : index
    %115 = vector.load %arg3[%c320, %c0_49] : memref<624x128xf32, #tpu.memory_space<vmem>>, vector<1x64xf32>
    %116 = vector.broadcast %115 : vector<1x64xf32> to vector<16x64xf32>
    %117 = arith.addf %114, %116 : vector<16x64xf32>
    %cst_50 = arith.constant 0.000000e+00 : f32
    %118 = vector.broadcast %cst_50 : f32 to vector<16x64xf32>
    %119 = arith.maximumf %117, %118 : vector<16x64xf32>
    %120 = arith.addf %90, %119 : vector<16x64xf32>
    %c64 = arith.constant 64 : index
    %c0_51 = arith.constant 0 : index
    %121 = vector.load %arg3[%c64, %c0_51] : memref<624x128xf32, #tpu.memory_space<vmem>>, vector<1x64xf32>
    %c72 = arith.constant 72 : index
    %c0_52 = arith.constant 0 : index
    %122 = vector.load %arg3[%c72, %c0_52] : memref<624x128xf32, #tpu.memory_space<vmem>>, vector<1x64xf32>
    %cst_53 = arith.constant dense<0.000000e+00> : vector<16xf32>
    %123 = vector.multi_reduction <add>, %120, %cst_53 [1] : vector<16x64xf32> to vector<16xf32>
    %124 = vector.shape_cast %123 : vector<16xf32> to vector<16x1xf32>
    %cst_54 = arith.constant 6.400000e+01 : f32
    %125 = vector.broadcast %cst_54 : f32 to vector<16x1xf32>
    %126 = arith.divf %124, %125 : vector<16x1xf32>
    %127 = vector.broadcast %126 : vector<16x1xf32> to vector<16x64xf32>
    %128 = arith.subf %120, %127 : vector<16x64xf32>
    %129 = arith.mulf %128, %128 : vector<16x64xf32>
    %cst_55 = arith.constant dense<0.000000e+00> : vector<16xf32>
    %130 = vector.multi_reduction <add>, %129, %cst_55 [1] : vector<16x64xf32> to vector<16xf32>
    %131 = vector.shape_cast %130 : vector<16xf32> to vector<16x1xf32>
    %cst_56 = arith.constant 6.400000e+01 : f32
    %132 = vector.broadcast %cst_56 : f32 to vector<16x1xf32>
    %133 = arith.divf %131, %132 : vector<16x1xf32>
    %cst_57 = arith.constant 9.99999974E-6 : f32
    %134 = vector.broadcast %cst_57 : f32 to vector<16x1xf32>
    %135 = arith.addf %133, %134 : vector<16x1xf32>
    %136 = math.rsqrt %135 : vector<16x1xf32>
    %137 = vector.broadcast %136 : vector<16x1xf32> to vector<16x64xf32>
    %138 = arith.mulf %128, %137 : vector<16x64xf32>
    %139 = vector.broadcast %121 : vector<1x64xf32> to vector<16x64xf32>
    %140 = arith.mulf %138, %139 : vector<16x64xf32>
    %141 = vector.broadcast %122 : vector<1x64xf32> to vector<16x64xf32>
    %142 = arith.addf %140, %141 : vector<16x64xf32>
    %c328 = arith.constant 328 : index
    %c0_58 = arith.constant 0 : index
    %143 = vector.load %arg3[%c328, %c0_58] : memref<624x128xf32, #tpu.memory_space<vmem>>, vector<9x64xf32>
    %cst_59 = arith.constant 0.000000e+00 : f32
    %144 = vector.broadcast %cst_59 : f32 to vector<16x64xf32>
    %c4_i32 = arith.constant 4 : i32
    %145 = tpu.dynamic_rotate %142 by %c4_i32 dim 0 : vector<16x64xf32>, i32 -> vector<16x64xf32>
    %c4_i32_60 = arith.constant 4 : i32
    %146 = vector.broadcast %c4_i32_60 : i32 to vector<16x1xi32>
    %147 = arith.cmpi sge, %4, %146 : vector<16x1xi32>
    %cst_61 = arith.constant 0.000000e+00 : f32
    %148 = vector.shape_cast %147 : vector<16x1xi1> to vector<16x1xi1>
    %149 = vector.broadcast %148 : vector<16x1xi1> to vector<16x64xi1>
    %150 = vector.broadcast %cst_61 : f32 to vector<16x64xf32>
    %151 = arith.select %149, %145, %150 : vector<16x64xi1>, vector<16x64xf32>
    %152 = vector.extract_strided_slice %143 {offsets = [0, 0], sizes = [1, 64], strides = [1, 1]} : vector<9x64xf32> to vector<1x64xf32>
    %153 = vector.broadcast %152 : vector<1x64xf32> to vector<16x64xf32>
    %154 = arith.mulf %151, %153 : vector<16x64xf32>
    %155 = arith.addf %144, %154 : vector<16x64xf32>
    %c3_i32 = arith.constant 3 : i32
    %156 = tpu.dynamic_rotate %142 by %c3_i32 dim 0 : vector<16x64xf32>, i32 -> vector<16x64xf32>
    %c3_i32_62 = arith.constant 3 : i32
    %157 = vector.broadcast %c3_i32_62 : i32 to vector<16x1xi32>
    %158 = arith.cmpi sge, %4, %157 : vector<16x1xi32>
    %cst_63 = arith.constant 0.000000e+00 : f32
    %159 = vector.shape_cast %158 : vector<16x1xi1> to vector<16x1xi1>
    %160 = vector.broadcast %159 : vector<16x1xi1> to vector<16x64xi1>
    %161 = vector.broadcast %cst_63 : f32 to vector<16x64xf32>
    %162 = arith.select %160, %156, %161 : vector<16x64xi1>, vector<16x64xf32>
    %163 = vector.extract_strided_slice %143 {offsets = [1, 0], sizes = [1, 64], strides = [1, 1]} : vector<9x64xf32> to vector<1x64xf32>
    %164 = vector.broadcast %163 : vector<1x64xf32> to vector<16x64xf32>
    %165 = arith.mulf %162, %164 : vector<16x64xf32>
    %166 = arith.addf %155, %165 : vector<16x64xf32>
    %c2_i32 = arith.constant 2 : i32
    %167 = tpu.dynamic_rotate %142 by %c2_i32 dim 0 : vector<16x64xf32>, i32 -> vector<16x64xf32>
    %c2_i32_64 = arith.constant 2 : i32
    %168 = vector.broadcast %c2_i32_64 : i32 to vector<16x1xi32>
    %169 = arith.cmpi sge, %4, %168 : vector<16x1xi32>
    %cst_65 = arith.constant 0.000000e+00 : f32
    %170 = vector.shape_cast %169 : vector<16x1xi1> to vector<16x1xi1>
    %171 = vector.broadcast %170 : vector<16x1xi1> to vector<16x64xi1>
    %172 = vector.broadcast %cst_65 : f32 to vector<16x64xf32>
    %173 = arith.select %171, %167, %172 : vector<16x64xi1>, vector<16x64xf32>
    %174 = vector.extract_strided_slice %143 {offsets = [2, 0], sizes = [1, 64], strides = [1, 1]} : vector<9x64xf32> to vector<1x64xf32>
    %175 = vector.broadcast %174 : vector<1x64xf32> to vector<16x64xf32>
    %176 = arith.mulf %173, %175 : vector<16x64xf32>
    %177 = arith.addf %166, %176 : vector<16x64xf32>
    %c1_i32_66 = arith.constant 1 : i32
    %178 = tpu.dynamic_rotate %142 by %c1_i32_66 dim 0 : vector<16x64xf32>, i32 -> vector<16x64xf32>
    %c1_i32_67 = arith.constant 1 : i32
    %179 = vector.broadcast %c1_i32_67 : i32 to vector<16x1xi32>
    %180 = arith.cmpi sge, %4, %179 : vector<16x1xi32>
    %cst_68 = arith.constant 0.000000e+00 : f32
    %181 = vector.shape_cast %180 : vector<16x1xi1> to vector<16x1xi1>
    %182 = vector.broadcast %181 : vector<16x1xi1> to vector<16x64xi1>
    %183 = vector.broadcast %cst_68 : f32 to vector<16x64xf32>
    %184 = arith.select %182, %178, %183 : vector<16x64xi1>, vector<16x64xf32>
    %185 = vector.extract_strided_slice %143 {offsets = [3, 0], sizes = [1, 64], strides = [1, 1]} : vector<9x64xf32> to vector<1x64xf32>
    %186 = vector.broadcast %185 : vector<1x64xf32> to vector<16x64xf32>
    %187 = arith.mulf %184, %186 : vector<16x64xf32>
    %188 = arith.addf %177, %187 : vector<16x64xf32>
    %189 = vector.extract_strided_slice %143 {offsets = [4, 0], sizes = [1, 64], strides = [1, 1]} : vector<9x64xf32> to vector<1x64xf32>
    %190 = vector.broadcast %189 : vector<1x64xf32> to vector<16x64xf32>
    %191 = arith.mulf %142, %190 : vector<16x64xf32>
    %192 = arith.addf %188, %191 : vector<16x64xf32>
    %c15_i32_69 = arith.constant 15 : i32
    %193 = tpu.dynamic_rotate %142 by %c15_i32_69 dim 0 : vector<16x64xf32>, i32 -> vector<16x64xf32>
    %c15_i32_70 = arith.constant 15 : i32
    %194 = vector.broadcast %c15_i32_70 : i32 to vector<16x1xi32>
    %195 = arith.cmpi slt, %4, %194 : vector<16x1xi32>
    %cst_71 = arith.constant 0.000000e+00 : f32
    %196 = vector.shape_cast %195 : vector<16x1xi1> to vector<16x1xi1>
    %197 = vector.broadcast %196 : vector<16x1xi1> to vector<16x64xi1>
    %198 = vector.broadcast %cst_71 : f32 to vector<16x64xf32>
    %199 = arith.select %197, %193, %198 : vector<16x64xi1>, vector<16x64xf32>
    %200 = vector.extract_strided_slice %143 {offsets = [5, 0], sizes = [1, 64], strides = [1, 1]} : vector<9x64xf32> to vector<1x64xf32>
    %201 = vector.broadcast %200 : vector<1x64xf32> to vector<16x64xf32>
    %202 = arith.mulf %199, %201 : vector<16x64xf32>
    %203 = arith.addf %192, %202 : vector<16x64xf32>
    %c14_i32 = arith.constant 14 : i32
    %204 = tpu.dynamic_rotate %142 by %c14_i32 dim 0 : vector<16x64xf32>, i32 -> vector<16x64xf32>
    %c14_i32_72 = arith.constant 14 : i32
    %205 = vector.broadcast %c14_i32_72 : i32 to vector<16x1xi32>
    %206 = arith.cmpi slt, %4, %205 : vector<16x1xi32>
    %cst_73 = arith.constant 0.000000e+00 : f32
    %207 = vector.shape_cast %206 : vector<16x1xi1> to vector<16x1xi1>
    %208 = vector.broadcast %207 : vector<16x1xi1> to vector<16x64xi1>
    %209 = vector.broadcast %cst_73 : f32 to vector<16x64xf32>
    %210 = arith.select %208, %204, %209 : vector<16x64xi1>, vector<16x64xf32>
    %211 = vector.extract_strided_slice %143 {offsets = [6, 0], sizes = [1, 64], strides = [1, 1]} : vector<9x64xf32> to vector<1x64xf32>
    %212 = vector.broadcast %211 : vector<1x64xf32> to vector<16x64xf32>
    %213 = arith.mulf %210, %212 : vector<16x64xf32>
    %214 = arith.addf %203, %213 : vector<16x64xf32>
    %c13_i32 = arith.constant 13 : i32
    %215 = tpu.dynamic_rotate %142 by %c13_i32 dim 0 : vector<16x64xf32>, i32 -> vector<16x64xf32>
    %c13_i32_74 = arith.constant 13 : i32
    %216 = vector.broadcast %c13_i32_74 : i32 to vector<16x1xi32>
    %217 = arith.cmpi slt, %4, %216 : vector<16x1xi32>
    %cst_75 = arith.constant 0.000000e+00 : f32
    %218 = vector.shape_cast %217 : vector<16x1xi1> to vector<16x1xi1>
    %219 = vector.broadcast %218 : vector<16x1xi1> to vector<16x64xi1>
    %220 = vector.broadcast %cst_75 : f32 to vector<16x64xf32>
    %221 = arith.select %219, %215, %220 : vector<16x64xi1>, vector<16x64xf32>
    %222 = vector.extract_strided_slice %143 {offsets = [7, 0], sizes = [1, 64], strides = [1, 1]} : vector<9x64xf32> to vector<1x64xf32>
    %223 = vector.broadcast %222 : vector<1x64xf32> to vector<16x64xf32>
    %224 = arith.mulf %221, %223 : vector<16x64xf32>
    %225 = arith.addf %214, %224 : vector<16x64xf32>
    %c12_i32 = arith.constant 12 : i32
    %226 = tpu.dynamic_rotate %142 by %c12_i32 dim 0 : vector<16x64xf32>, i32 -> vector<16x64xf32>
    %c12_i32_76 = arith.constant 12 : i32
    %227 = vector.broadcast %c12_i32_76 : i32 to vector<16x1xi32>
    %228 = arith.cmpi slt, %4, %227 : vector<16x1xi32>
    %cst_77 = arith.constant 0.000000e+00 : f32
    %229 = vector.shape_cast %228 : vector<16x1xi1> to vector<16x1xi1>
    %230 = vector.broadcast %229 : vector<16x1xi1> to vector<16x64xi1>
    %231 = vector.broadcast %cst_77 : f32 to vector<16x64xf32>
    %232 = arith.select %230, %226, %231 : vector<16x64xi1>, vector<16x64xf32>
    %233 = vector.extract_strided_slice %143 {offsets = [8, 0], sizes = [1, 64], strides = [1, 1]} : vector<9x64xf32> to vector<1x64xf32>
    %234 = vector.broadcast %233 : vector<1x64xf32> to vector<16x64xf32>
    %235 = arith.mulf %232, %234 : vector<16x64xf32>
    %236 = arith.addf %225, %235 : vector<16x64xf32>
    %c344 = arith.constant 344 : index
    %c0_78 = arith.constant 0 : index
    %237 = vector.load %arg3[%c344, %c0_78] : memref<624x128xf32, #tpu.memory_space<vmem>>, vector<1x64xf32>
    %238 = vector.broadcast %237 : vector<1x64xf32> to vector<16x64xf32>
    %239 = arith.addf %236, %238 : vector<16x64xf32>
    %c352 = arith.constant 352 : index
    %c0_79 = arith.constant 0 : index
    %240 = vector.load %arg3[%c352, %c0_79] : memref<624x128xf32, #tpu.memory_space<vmem>>, vector<64x32xf32>
    %cst_80 = arith.constant dense<0.000000e+00> : vector<16x32xf32>
    %241 = tpu.matmul %239, %240, %cst_80 {dimension_numbers = #tpu.dot_dimension_numbers<[1], [0], [0], [1], [0, 0, 1, 1], [], []>} : vector<16x64xf32>, vector<64x32xf32>, vector<16x32xf32> -> vector<16x32xf32>
    %c416 = arith.constant 416 : index
    %c0_81 = arith.constant 0 : index
    %242 = vector.load %arg3[%c416, %c0_81] : memref<624x128xf32, #tpu.memory_space<vmem>>, vector<1x32xf32>
    %243 = vector.broadcast %242 : vector<1x32xf32> to vector<16x32xf32>
    %244 = arith.addf %241, %243 : vector<16x32xf32>
    %245 = arith.addf %244, %61 : vector<16x32xf32>
    %c32 = arith.constant 32 : index
    %c0_82 = arith.constant 0 : index
    %246 = vector.load %arg3[%c32, %c0_82] : memref<624x128xf32, #tpu.memory_space<vmem>>, vector<1x32xf32>
    %c40 = arith.constant 40 : index
    %c0_83 = arith.constant 0 : index
    %247 = vector.load %arg3[%c40, %c0_83] : memref<624x128xf32, #tpu.memory_space<vmem>>, vector<1x32xf32>
    %cst_84 = arith.constant dense<0.000000e+00> : vector<16xf32>
    %248 = vector.multi_reduction <add>, %245, %cst_84 [1] : vector<16x32xf32> to vector<16xf32>
    %249 = vector.shape_cast %248 : vector<16xf32> to vector<16x1xf32>
    %cst_85 = arith.constant 3.200000e+01 : f32
    %250 = vector.broadcast %cst_85 : f32 to vector<16x1xf32>
    %251 = arith.divf %249, %250 : vector<16x1xf32>
    %252 = vector.broadcast %251 : vector<16x1xf32> to vector<16x32xf32>
    %253 = arith.subf %245, %252 : vector<16x32xf32>
    %254 = arith.mulf %253, %253 : vector<16x32xf32>
    %cst_86 = arith.constant dense<0.000000e+00> : vector<16xf32>
    %255 = vector.multi_reduction <add>, %254, %cst_86 [1] : vector<16x32xf32> to vector<16xf32>
    %256 = vector.shape_cast %255 : vector<16xf32> to vector<16x1xf32>
    %cst_87 = arith.constant 3.200000e+01 : f32
    %257 = vector.broadcast %cst_87 : f32 to vector<16x1xf32>
    %258 = arith.divf %256, %257 : vector<16x1xf32>
    %cst_88 = arith.constant 9.99999974E-6 : f32
    %259 = vector.broadcast %cst_88 : f32 to vector<16x1xf32>
    %260 = arith.addf %258, %259 : vector<16x1xf32>
    %261 = math.rsqrt %260 : vector<16x1xf32>
    %262 = vector.broadcast %261 : vector<16x1xf32> to vector<16x32xf32>
    %263 = arith.mulf %253, %262 : vector<16x32xf32>
    %264 = vector.broadcast %246 : vector<1x32xf32> to vector<16x32xf32>
    %265 = arith.mulf %263, %264 : vector<16x32xf32>
    %266 = vector.broadcast %247 : vector<1x32xf32> to vector<16x32xf32>
    %267 = arith.addf %265, %266 : vector<16x32xf32>
    %c424 = arith.constant 424 : index
    %c0_89 = arith.constant 0 : index
    %268 = vector.load %arg3[%c424, %c0_89] : memref<624x128xf32, #tpu.memory_space<vmem>>, vector<32x96xf32>
    %cst_90 = arith.constant dense<0.000000e+00> : vector<16x96xf32>
    %269 = tpu.matmul %267, %268, %cst_90 {dimension_numbers = #tpu.dot_dimension_numbers<[1], [0], [0], [1], [0, 0, 1, 1], [], []>} : vector<16x32xf32>, vector<32x96xf32>, vector<16x96xf32> -> vector<16x96xf32>
    %c456 = arith.constant 456 : index
    %c0_91 = arith.constant 0 : index
    %270 = vector.load %arg3[%c456, %c0_91] : memref<624x128xf32, #tpu.memory_space<vmem>>, vector<1x96xf32>
    %271 = vector.broadcast %270 : vector<1x96xf32> to vector<16x96xf32>
    %272 = arith.addf %269, %271 : vector<16x96xf32>
    %273 = vector.extract_strided_slice %272 {offsets = [0, 0], sizes = [16, 32], strides = [1, 1]} : vector<16x96xf32> to vector<16x32xf32>
    %274 = vector.extract_strided_slice %272 {offsets = [0, 32], sizes = [16, 32], strides = [1, 1]} : vector<16x96xf32> to vector<16x32xf32>
    %275 = vector.extract_strided_slice %272 {offsets = [0, 64], sizes = [16, 32], strides = [1, 1]} : vector<16x96xf32> to vector<16x32xf32>
    %c616 = arith.constant 616 : index
    %c0_92 = arith.constant 0 : index
    %276 = vector.load %arg3[%c616, %c0_92] : memref<624x128xf32, #tpu.memory_space<vmem>>, vector<4x32xf32>
    %cst_93 = arith.constant 5.000000e-01 : f32
    %277 = vector.broadcast %cst_93 : f32 to vector<1x16xf32>
    %278 = arith.cmpf ogt, %3, %277 : vector<1x16xf32>
    %cst_94 = arith.constant -1.000000e+30 : f32
    %cst_95 = arith.constant 0.000000e+00 : f32
    %279 = vector.broadcast %cst_94 : f32 to vector<1x16xf32>
    %280 = vector.broadcast %cst_95 : f32 to vector<1x16xf32>
    %281 = arith.select %278, %279, %280 : vector<1x16xi1>, vector<1x16xf32>
    %282 = vector.extract_strided_slice %276 {offsets = [0, 0], sizes = [1, 32], strides = [1, 1]} : vector<4x32xf32> to vector<1x32xf32>
    %283 = vector.broadcast %282 : vector<1x32xf32> to vector<16x32xf32>
    %284 = arith.mulf %273, %283 : vector<16x32xf32>
    %285 = vector.extract_strided_slice %276 {offsets = [1, 0], sizes = [1, 32], strides = [1, 1]} : vector<4x32xf32> to vector<1x32xf32>
    %286 = vector.broadcast %285 : vector<1x32xf32> to vector<16x32xf32>
    %287 = arith.mulf %273, %286 : vector<16x32xf32>
    %288 = vector.extract_strided_slice %276 {offsets = [2, 0], sizes = [1, 32], strides = [1, 1]} : vector<4x32xf32> to vector<1x32xf32>
    %289 = vector.broadcast %288 : vector<1x32xf32> to vector<16x32xf32>
    %290 = arith.mulf %273, %289 : vector<16x32xf32>
    %291 = vector.extract_strided_slice %276 {offsets = [3, 0], sizes = [1, 32], strides = [1, 1]} : vector<4x32xf32> to vector<1x32xf32>
    %292 = vector.broadcast %291 : vector<1x32xf32> to vector<16x32xf32>
    %293 = arith.mulf %273, %292 : vector<16x32xf32>
    %294 = tpu.concatenate %284, %287, %290, %293 in 0 : vector<16x32xf32>, vector<16x32xf32>, vector<16x32xf32>, vector<16x32xf32> -> vector<64x32xf32>
    %cst_96 = arith.constant dense<0.000000e+00> : vector<64x16xf32>
    %295 = tpu.matmul %294, %274, %cst_96 {dimension_numbers = #tpu.dot_dimension_numbers<[1], [1], [0], [0], [0, 0, 1, 0], [], []>} : vector<64x32xf32>, vector<16x32xf32>, vector<64x16xf32> -> vector<64x16xf32>
    %cst_97 = arith.constant 0.353553385 : f32
    %296 = vector.broadcast %cst_97 : f32 to vector<64x16xf32>
    %297 = arith.mulf %295, %296 : vector<64x16xf32>
    %298 = vector.broadcast %281 : vector<1x16xf32> to vector<64x16xf32>
    %299 = arith.addf %297, %298 : vector<64x16xf32>
    %cst_98 = arith.constant dense<0xFF800000> : vector<64xf32>
    %300 = vector.multi_reduction <maximumf>, %299, %cst_98 [1] : vector<64x16xf32> to vector<64xf32>
    %301 = vector.shape_cast %300 : vector<64xf32> to vector<64x1xf32>
    %302 = vector.broadcast %301 : vector<64x1xf32> to vector<64x16xf32>
    %303 = arith.subf %299, %302 : vector<64x16xf32>
    %304 = math.exp %303 : vector<64x16xf32>
    %cst_99 = arith.constant dense<0.000000e+00> : vector<64xf32>
    %305 = vector.multi_reduction <add>, %304, %cst_99 [1] : vector<64x16xf32> to vector<64xf32>
    %306 = vector.shape_cast %305 : vector<64xf32> to vector<64x1xf32>
    %307 = tpu.reciprocal %306 {approx = true} : vector<64x1xf32> -> vector<64x1xf32>
    %308 = vector.broadcast %307 : vector<64x1xf32> to vector<64x16xf32>
    %309 = arith.mulf %304, %308 : vector<64x16xf32>
    %cst_100 = arith.constant dense<0.000000e+00> : vector<64x32xf32>
    %310 = tpu.matmul %309, %275, %cst_100 {dimension_numbers = #tpu.dot_dimension_numbers<[1], [0], [0], [1], [0, 0, 1, 1], [], []>} : vector<64x16xf32>, vector<16x32xf32>, vector<64x32xf32> -> vector<64x32xf32>
    %cst_101 = arith.constant 0.000000e+00 : f32
    %311 = vector.broadcast %cst_101 : f32 to vector<16x32xf32>
    %312 = vector.extract_strided_slice %310 {offsets = [0, 0], sizes = [16, 32], strides = [1, 1]} : vector<64x32xf32> to vector<16x32xf32>
    %313 = vector.extract_strided_slice %276 {offsets = [0, 0], sizes = [1, 32], strides = [1, 1]} : vector<4x32xf32> to vector<1x32xf32>
    %314 = vector.broadcast %313 : vector<1x32xf32> to vector<16x32xf32>
    %315 = arith.mulf %312, %314 : vector<16x32xf32>
    %316 = arith.addf %311, %315 : vector<16x32xf32>
    %317 = vector.extract_strided_slice %310 {offsets = [16, 0], sizes = [16, 32], strides = [1, 1]} : vector<64x32xf32> to vector<16x32xf32>
    %318 = vector.extract_strided_slice %276 {offsets = [1, 0], sizes = [1, 32], strides = [1, 1]} : vector<4x32xf32> to vector<1x32xf32>
    %319 = vector.broadcast %318 : vector<1x32xf32> to vector<16x32xf32>
    %320 = arith.mulf %317, %319 : vector<16x32xf32>
    %321 = arith.addf %316, %320 : vector<16x32xf32>
    %322 = vector.extract_strided_slice %310 {offsets = [32, 0], sizes = [16, 32], strides = [1, 1]} : vector<64x32xf32> to vector<16x32xf32>
    %323 = vector.extract_strided_slice %276 {offsets = [2, 0], sizes = [1, 32], strides = [1, 1]} : vector<4x32xf32> to vector<1x32xf32>
    %324 = vector.broadcast %323 : vector<1x32xf32> to vector<16x32xf32>
    %325 = arith.mulf %322, %324 : vector<16x32xf32>
    %326 = arith.addf %321, %325 : vector<16x32xf32>
    %327 = vector.extract_strided_slice %310 {offsets = [48, 0], sizes = [16, 32], strides = [1, 1]} : vector<64x32xf32> to vector<16x32xf32>
    %328 = vector.extract_strided_slice %276 {offsets = [3, 0], sizes = [1, 32], strides = [1, 1]} : vector<4x32xf32> to vector<1x32xf32>
    %329 = vector.broadcast %328 : vector<1x32xf32> to vector<16x32xf32>
    %330 = arith.mulf %327, %329 : vector<16x32xf32>
    %331 = arith.addf %326, %330 : vector<16x32xf32>
    %c464 = arith.constant 464 : index
    %c0_102 = arith.constant 0 : index
    %332 = vector.load %arg3[%c464, %c0_102] : memref<624x128xf32, #tpu.memory_space<vmem>>, vector<32x32xf32>
    %cst_103 = arith.constant dense<0.000000e+00> : vector<16x32xf32>
    %333 = tpu.matmul %331, %332, %cst_103 {dimension_numbers = #tpu.dot_dimension_numbers<[1], [0], [0], [1], [0, 0, 1, 1], [], []>} : vector<16x32xf32>, vector<32x32xf32>, vector<16x32xf32> -> vector<16x32xf32>
    %c496 = arith.constant 496 : index
    %c0_104 = arith.constant 0 : index
    %334 = vector.load %arg3[%c496, %c0_104] : memref<624x128xf32, #tpu.memory_space<vmem>>, vector<1x32xf32>
    %335 = vector.broadcast %334 : vector<1x32xf32> to vector<16x32xf32>
    %336 = arith.addf %333, %335 : vector<16x32xf32>
    %337 = arith.addf %267, %336 : vector<16x32xf32>
    %c48 = arith.constant 48 : index
    %c0_105 = arith.constant 0 : index
    %338 = vector.load %arg3[%c48, %c0_105] : memref<624x128xf32, #tpu.memory_space<vmem>>, vector<1x32xf32>
    %c56 = arith.constant 56 : index
    %c0_106 = arith.constant 0 : index
    %339 = vector.load %arg3[%c56, %c0_106] : memref<624x128xf32, #tpu.memory_space<vmem>>, vector<1x32xf32>
    %cst_107 = arith.constant dense<0.000000e+00> : vector<16xf32>
    %340 = vector.multi_reduction <add>, %337, %cst_107 [1] : vector<16x32xf32> to vector<16xf32>
    %341 = vector.shape_cast %340 : vector<16xf32> to vector<16x1xf32>
    %cst_108 = arith.constant 3.200000e+01 : f32
    %342 = vector.broadcast %cst_108 : f32 to vector<16x1xf32>
    %343 = arith.divf %341, %342 : vector<16x1xf32>
    %344 = vector.broadcast %343 : vector<16x1xf32> to vector<16x32xf32>
    %345 = arith.subf %337, %344 : vector<16x32xf32>
    %346 = arith.mulf %345, %345 : vector<16x32xf32>
    %cst_109 = arith.constant dense<0.000000e+00> : vector<16xf32>
    %347 = vector.multi_reduction <add>, %346, %cst_109 [1] : vector<16x32xf32> to vector<16xf32>
    %348 = vector.shape_cast %347 : vector<16xf32> to vector<16x1xf32>
    %cst_110 = arith.constant 3.200000e+01 : f32
    %349 = vector.broadcast %cst_110 : f32 to vector<16x1xf32>
    %350 = arith.divf %348, %349 : vector<16x1xf32>
    %cst_111 = arith.constant 9.99999974E-6 : f32
    %351 = vector.broadcast %cst_111 : f32 to vector<16x1xf32>
    %352 = arith.addf %350, %351 : vector<16x1xf32>
    %353 = math.rsqrt %352 : vector<16x1xf32>
    %354 = vector.broadcast %353 : vector<16x1xf32> to vector<16x32xf32>
    %355 = arith.mulf %345, %354 : vector<16x32xf32>
    %356 = vector.broadcast %338 : vector<1x32xf32> to vector<16x32xf32>
    %357 = arith.mulf %355, %356 : vector<16x32xf32>
    %358 = vector.broadcast %339 : vector<1x32xf32> to vector<16x32xf32>
    %359 = arith.addf %357, %358 : vector<16x32xf32>
    %c504 = arith.constant 504 : index
    %c0_112 = arith.constant 0 : index
    %360 = vector.load %arg3[%c504, %c0_112] : memref<624x128xf32, #tpu.memory_space<vmem>>, vector<32x64xf32>
    %cst_113 = arith.constant dense<0.000000e+00> : vector<16x64xf32>
    %361 = tpu.matmul %359, %360, %cst_113 {dimension_numbers = #tpu.dot_dimension_numbers<[1], [0], [0], [1], [0, 0, 1, 1], [], []>} : vector<16x32xf32>, vector<32x64xf32>, vector<16x64xf32> -> vector<16x64xf32>
    %c536 = arith.constant 536 : index
    %c0_114 = arith.constant 0 : index
    %362 = vector.load %arg3[%c536, %c0_114] : memref<624x128xf32, #tpu.memory_space<vmem>>, vector<1x64xf32>
    %363 = vector.broadcast %362 : vector<1x64xf32> to vector<16x64xf32>
    %364 = arith.addf %361, %363 : vector<16x64xf32>
    %365 = arith.negf %364 : vector<16x64xf32>
    %366 = math.exp %365 : vector<16x64xf32>
    %cst_115 = arith.constant 1.000000e+00 : f32
    %367 = vector.broadcast %cst_115 : f32 to vector<16x64xf32>
    %368 = arith.addf %367, %366 : vector<16x64xf32>
    %369 = arith.divf %367, %368 : vector<16x64xf32>
    %370 = arith.mulf %364, %369 : vector<16x64xf32>
    %c544 = arith.constant 544 : index
    %c0_116 = arith.constant 0 : index
    %371 = vector.load %arg3[%c544, %c0_116] : memref<624x128xf32, #tpu.memory_space<vmem>>, vector<64x32xf32>
    %cst_117 = arith.constant dense<0.000000e+00> : vector<16x32xf32>
    %372 = tpu.matmul %370, %371, %cst_117 {dimension_numbers = #tpu.dot_dimension_numbers<[1], [0], [0], [1], [0, 0, 1, 1], [], []>} : vector<16x64xf32>, vector<64x32xf32>, vector<16x32xf32> -> vector<16x32xf32>
    %c608 = arith.constant 608 : index
    %c0_118 = arith.constant 0 : index
    %373 = vector.load %arg3[%c608, %c0_118] : memref<624x128xf32, #tpu.memory_space<vmem>>, vector<1x32xf32>
    %374 = vector.broadcast %373 : vector<1x32xf32> to vector<16x32xf32>
    %375 = arith.addf %372, %374 : vector<16x32xf32>
    %376 = arith.addf %375, %337 : vector<16x32xf32>
    %c0_119 = arith.constant 0 : index
    %c0_120 = arith.constant 0 : index
    %c0_121 = arith.constant 0 : index
    %377 = vector.load %arg4[%c0_119, %c0_120, %c0_121] : memref<1x16x32xf32, #tpu.memory_space<vmem>>, vector<1x16x32xf32>
    %378 = vector.shape_cast %377 : vector<1x16x32xf32> to vector<16x32xf32>
    %379 = vector.shape_cast %376 : vector<16x32xf32> to vector<1x16x32xf32>
    tpu.vector_store %arg4[%c0_119, %c0_120, %c0_121], %379 {strides = array<i32>} : memref<1x16x32xf32, #tpu.memory_space<vmem>>, vector<1x16x32xf32>,
    return
  }
  func.func @transform_0(%arg0: i32) -> (i32, i32, i32) {
    %c0_i32 = arith.constant 0 : i32
    %c0_i32_0 = arith.constant 0 : i32
    %c0_i32_1 = arith.constant 0 : i32
    return %arg0, %c0_i32, %c0_i32_0 : i32, i32, i32
  }
  func.func @transform_1(%arg0: i32) -> (i32, i32, i32) {
    %c0_i32 = arith.constant 0 : i32
    %c0_i32_0 = arith.constant 0 : i32
    %c0_i32_1 = arith.constant 0 : i32
    return %arg0, %c0_i32, %c0_i32_0 : i32, i32, i32
  }
  func.func @transform_2(%arg0: i32) -> (i32, i32) {
    %c0_i32 = arith.constant 0 : i32
    %c0_i32_0 = arith.constant 0 : i32
    %c0_i32_1 = arith.constant 0 : i32
    return %c0_i32, %c0_i32_0 : i32, i32
  }
  func.func @transform_3(%arg0: i32) -> (i32, i32, i32) {
    %c0_i32 = arith.constant 0 : i32
    %c0_i32_0 = arith.constant 0 : i32
    %c0_i32_1 = arith.constant 0 : i32
    return %arg0, %c0_i32, %c0_i32_0 : i32, i32, i32
  }
}

</mosaic_0001>

<llo_original>
// kernel: run.1
$region0: #{run.1}
  #allocation0 [shape = 'u32[]', space=smem, size = 0x4, offset = 0x4, fixed_abs, tag = 'smem constant byte address 0x4 - core index']
  #allocation1 [shape = 'u32[144,128]{1,0:T(1,128)}', space=vmem, size = 0x12000, scoped, tag = 'internal scratch']
  %s0 = inlined_call_operand.hbm [shape: f32[2,16,32], index: 0, kind: input, shape index: {}]
  %s1 = inlined_call_operand.vmem [shape: f32[2,1,16], index: 1, kind: input, shape index: {}]
  %s2 = inlined_call_operand.hbm [shape: f32[624,128], index: 2, kind: input, shape index: {}]
  %s3 = inlined_call_operand.hbm [shape: f32[2,16,32], index: 3, kind: output, shape index: {}]
  %s4 = sld [smem:[#allocation0]]
  $region53: #{run.1} parent=0
    _
  %s6 = ssub.s32 1, %s4
  %s7 = scalar_select 0, %s6, %s4
  $region1: #{run.1} parent=0
    #allocation2 [shape = 'u8[16384]{0}', space=vmem, size = 0x4000, scoped, tag = 'input window, operand 0']
    #allocation3 [shape = 's32[2]{0}', space=sflag, size = 0x8, scoped, tag = 'scoped memory for run.1']
    #allocation4 [shape = 's32[2]{0}', space=sflag, size = 0x8, scoped, tag = 'scoped memory for run.1']
    #allocation5 [shape = 'u8[319488]{0}', space=vmem, size = 0x4e000, scoped, tag = 'input window, operand 2, single buffered']
    #allocation6 [shape = 's32[1]{0}', space=sflag, size = 0x4, scoped, tag = 'scoped memory for run.1']
    #allocation7 [shape = 'u8[16384]{0}', space=vmem, size = 0x4000, scoped, tag = 'output window, operand 0']
    %8 = vsyncpa [#allocation3], 0
    %s9 = scalar_lea.sflag [#allocation3], 1
    %10 = vsyncpa %s9, 0
    %11 = vsyncpa [#allocation6], 0
    %12 = vsyncpa [#allocation4], 0
    %s13 = scalar_lea.sflag [#allocation4], 1
    %14 = vsyncpa %s13, 0
    loop: start=0, step=1, limit=4
    $region2: #{run.1} parent=1 // loop_pre_header
      _
    $region3: #{run.1} parent=1 // loop_header
      %s16 = sphi 0, %s20
      %p17 = scmp.ge.s32.totalorder %s16, 4
      %s26 = sphi 0, %s28
      %s29 = sphi 0, %s26
      %s30 = sphi 0, %s29
      %s46 = sphi 0, %s30
      %s52 = sphi 0, %s54
      %s55 = sphi 0, %s52
      %s56 = sphi 0, %s55
      %s72 = sphi 0, %s56
      %s76 = sphi 0, %s76
      %s78 = sphi 0, %s76
      %s79 = sphi 0, %s78
      %s93 = sphi 0, %s79
      %s99 = sphi 0, %s101
      %s102 = sphi 0, %s99
      %s103 = sphi 0, %s102
      %s119 = sphi 0, %s103
    $region4: #{run.1} parent=1 // loop_header_branch
      %19 = sbr.rel (%p17) target = $region8
    $region5: #{run.1} parent=1 // loop_body
      %s21 = ssub.s32 %s16, 1
      %s22 = ssub.s32 %s16, 2
      %s23 = sadd.s32 %s16, 1
      %s24 = ssub.s32 %s16, %s23
      %p25 = scmp.eq.s32.totalorder %s24, 0
      %s27 = sadd.s32 %s26, 1
      %s28 = scalar_select %p25, %s26, %s27
      %p31 = pneg %p25
      %p32 = scmp.eq.s32.totalorder %s16, 1
      %p33 = por %p31, %p32
      %p34 = scmp.ne.s32.totalorder %s26, %s29
      %p35 = scmp.eq.s32.totalorder %s16, 0
      %p36 = por %p34, %p35
      %p37 = scmp.ne.s32.totalorder %s26, %s29
      %p38 = scmp.eq.s32.totalorder %s21, 1
      %p39 = por %p37, %p38
      %p40 = scmp.ne.s32.totalorder %s29, %s30
      %p41 = scmp.eq.s32.totalorder %s21, 0
      %p42 = por %p40, %p41
      %p43 = scmp.ne.s32.totalorder %s29, %s30
      %p44 = scmp.eq.s32.totalorder %s22, 1
      %p45 = por %p43, %p44
      %p47 = scmp.ne.s32.totalorder %s30, %s46
      %p48 = scmp.eq.s32.totalorder %s22, 0
      %p49 = por %p47, %p48
      %s50 = ssub.s32 %s16, %s23
      %p51 = scmp.eq.s32.totalorder %s50, 0
      %s53 = sadd.s32 %s52, 1
      %s54 = scalar_select %p51, %s52, %s53
      %p57 = pneg %p51
      %p58 = scmp.eq.s32.totalorder %s16, 1
      %p59 = por %p57, %p58
      %p60 = scmp.ne.s32.totalorder %s52, %s55
      %p61 = scmp.eq.s32.totalorder %s16, 0
      %p62 = por %p60, %p61
      %p63 = scmp.ne.s32.totalorder %s52, %s55
      %p64 = scmp.eq.s32.totalorder %s21, 1
      %p65 = por %p63, %p64
      %p66 = scmp.ne.s32.totalorder %s55, %s56
      %p67 = scmp.eq.s32.totalorder %s21, 0
      %p68 = por %p66, %p67
      %p69 = scmp.ne.s32.totalorder %s55, %s56
      %p70 = scmp.eq.s32.totalorder %s22, 1
      %p71 = por %p69, %p70
      %p73 = scmp.ne.s32.totalorder %s56, %s72
      %p74 = scmp.eq.s32.totalorder %s22, 0
      %p75 = por %p73, %p74
      %s77 = sadd.s32 %s76, 1
      %p80 = scmp.eq.s32.totalorder %s16, 1
      %p81 = scmp.ne.s32.totalorder %s76, %s78
      %p82 = scmp.eq.s32.totalorder %s16, 0
      %p83 = por %p81, %p82
      %p84 = scmp.ne.s32.totalorder %s76, %s78
      %p85 = scmp.eq.s32.totalorder %s21, 1
      %p86 = por %p84, %p85
      %p87 = scmp.ne.s32.totalorder %s78, %s79
      %p88 = scmp.eq.s32.totalorder %s21, 0
      %p89 = por %p87, %p88
      %p90 = scmp.ne.s32.totalorder %s78, %s79
      %p91 = scmp.eq.s32.totalorder %s22, 1
      %p92 = por %p90, %p91
      %p94 = scmp.ne.s32.totalorder %s79, %s93
      %p95 = scmp.eq.s32.totalorder %s22, 0
      %p96 = por %p94, %p95
      %s97 = ssub.s32 %s16, %s23
      %p98 = scmp.eq.s32.totalorder %s97, 0
      %s100 = sadd.s32 %s99, 1
      %s101 = scalar_select %p98, %s99, %s100
      %p104 = pneg %p98
      %p105 = scmp.eq.s32.totalorder %s16, 1
      %p106 = por %p104, %p105
      %p107 = scmp.ne.s32.totalorder %s99, %s102
      %p108 = scmp.eq.s32.totalorder %s16, 0
      %p109 = por %p107, %p108
      %p110 = scmp.ne.s32.totalorder %s99, %s102
      %p111 = scmp.eq.s32.totalorder %s21, 1
      %p112 = por %p110, %p111
      %p113 = scmp.ne.s32.totalorder %s102, %s103
      %p114 = scmp.eq.s32.totalorder %s21, 0
      %p115 = por %p113, %p114
      %p116 = scmp.ne.s32.totalorder %s102, %s103
      %p117 = scmp.eq.s32.totalorder %s22, 1
      %p118 = por %p116, %p117
      %p120 = scmp.ne.s32.totalorder %s103, %s119
      %p121 = scmp.eq.s32.totalorder %s22, 0
      %p122 = por %p120, %p121
      %p123 = scmp.le.s32.totalorder 1, %s16
      %p124 = scmp.lt.s32.totalorder %s16, 3
      %p125 = pnand %p123, %p124
      %p126 = pneg %p125
      // Predicated region
      $region9: #{run.1} parent=5 // pred_check
        _
      $region10: #{run.1} parent=5 // pred_check_branch
        %128 = sbr.rel (%p125) target = $region12
      $region11: #{run.1} parent=5 // pred_region
        %s129 = ssub.s32 %s16, 1
        // Predicated region
        $region13: #{run.1} parent=11 // pred_check
          %p130 = pneg %p89
        $region14: #{run.1} parent=11 // pred_check_branch
          %132 = sbr.rel (%p130) target = $region16
        $region15: #{run.1} parent=11 // pred_region
          %s134 = ssub.s32 9984, 9984
          %135 = vsyncadd [#allocation6], %s134
          %s136 = sshll.u32 [#allocation5], 4
          %s137 = int_to_ptr.vmem [resolvable:$true] %s136
          %142 = dma.hbm_to_vmem [thread:$0]  %s2, 9984, %s137, [#allocation6], 128, 128, 8
        $region16: #{run.1} parent=11 // pred_fallthru
          _
      $region12: #{run.1} parent=5 // pred_fallthru
        _
      %p143 = scmp.lt.s32.totalorder %s16, 2
      // Predicated region
      $region17: #{run.1} parent=5 // pred_check
        %p144 = pneg %p143
      $region18: #{run.1} parent=5 // pred_check_branch
        %146 = sbr.rel (%p144) target = $region20
      $region19: #{run.1} parent=5 // pred_region
        // Predicated region
        $region21: #{run.1} parent=19 // pred_check
          %p147 = pneg %p36
        $region22: #{run.1} parent=19 // pred_check_branch
          %149 = sbr.rel (%p147) target = $region24
        $region23: #{run.1} parent=19 // pred_region
          %s150 = sand.u32 %s26, 1
          %s151 = scalar_lea.sflag [#allocation3], %s150
          %s152 = sand.u32 %s26, 1
          %s153 = smul.addr %s152, 16
          %s154 = scalar_lea.vmem [#allocation2], %s153
          %s156 = ssub.s32 256, 256
          %157 = vsyncadd %s151, %s156
          %s158 = smul.addr %s16, 2
          %s159 = smul.addr %s158, 128
          %s160 = scalar_lea.hbm %s0, %s159
          %s161 = sshll.u32 %s154, 4
          %s162 = int_to_ptr.vmem [resolvable:$true] %s161
          %167 = dma.hbm_to_vmem [thread:$0]  %s160, 256, %s162, %s151, 128, 128, 8
        $region24: #{run.1} parent=19 // pred_fallthru
          _
        // Predicated region
        $region25: #{run.1} parent=19 // pred_check
          %p168 = pneg %p62
        $region26: #{run.1} parent=19 // pred_check_branch
          %170 = sbr.rel (%p168) target = $region28
        $region27: #{run.1} parent=19 // pred_region
          %p171 = scmp.lt.s32.totalorder %s16, 1
          %s172 = scalar_select %p171, %s16, 1
          %s173 = scalar_lea.vmem %s1, %s172
        $region28: #{run.1} parent=19 // pred_fallthru
          _
      $region20: #{run.1} parent=5 // pred_fallthru
        _
      %p174 = scmp.le.s32.totalorder 1, %s16
      %p175 = scmp.lt.s32.totalorder %s16, 3
      %p176 = pnand %p174, %p175
      %p177 = pneg %p176
      // Predicated region
      $region29: #{run.1} parent=5 // pred_check
        _
      $region30: #{run.1} parent=5 // pred_check_branch
        %179 = sbr.rel (%p176) target = $region32
      $region31: #{run.1} parent=5 // pred_region
        %s180 = ssub.s32 %s16, 1
        %s181 = sand.u32 %s29, 1
        %s182 = scalar_lea.sflag [#allocation3], %s181
        %s183 = sand.u32 %s29, 1
        %s184 = smul.addr %s183, 16
        %s185 = scalar_lea.vmem [#allocation2], %s184
        // Predicated region
        $region33: #{run.1} parent=31 // pred_check
          %p186 = pneg %p42
        $region34: #{run.1} parent=31 // pred_check_branch
          %188 = sbr.rel (%p186) target = $region36
        $region35: #{run.1} parent=31 // pred_region
          %189 = dma.done %s182, 256
        $region36: #{run.1} parent=31 // pred_fallthru
          _
        // Predicated region
        $region37: #{run.1} parent=31 // pred_check
          %p190 = pneg %p89
        $region38: #{run.1} parent=31 // pred_check_branch
          %192 = sbr.rel (%p190) target = $region40
        $region39: #{run.1} parent=31 // pred_region
          %193 = dma.done [#allocation6], 9984
        $region40: #{run.1} parent=31 // pred_fallthru
          _
        %s194 = sand.u32 %s29, 1
        %s195 = scalar_lea.sflag [#allocation3], %s194
        %s196 = sand.u32 %s29, 1
        %s197 = smul.addr %s196, 16
        %s198 = scalar_lea.vmem [#allocation2], %s197
        %p199 = pneg %p42
        %p200 = pneg %p39
        %p201 = scmp.lt.s32.totalorder %s21, 1
        %s202 = scalar_select %p201, %s21, 1
        %s203 = scalar_lea.vmem %s1, %s202
        %p204 = pneg %p68
        %p205 = pneg %p65
        %p206 = pneg %p89
        %p207 = pneg %p86
        %p208 = pneg %p115
        %p209 = pneg %p112
        %s210 = sand.u32 %s102, 1
        %s211 = scalar_lea.sflag [#allocation4], %s210
        %s212 = sand.u32 %s102, 1
        %s213 = smul.addr %s212, 16
        %s214 = scalar_lea.vmem [#allocation7], %s213
        %p215 = scmp.lt.s32.totalorder %s21, 1
        %s216 = scalar_select %p215, %s21, 1
        %s217 = scalar_lea.vmem %s1, %s216
        %v218 = vld [vmem:[%s185] sm:$0xff]
        %v219 = vld [vmem:[%s185 + $0x8] sm:$0xff]
        %v220 = vld [vmem:[%s217] sm:$0x1]
        %v221 = vlaneseq
        %v222 = vshrl.u32 %v221, 7
        %v223 = vadd.s32 %v222, 8
        %v224 = vld [vmem:[#allocation5] sm:$0x1]
        %v225 = vld [vmem:[#allocation5 + $0x8] sm:$0x1]
        %vm226 = vcmask 261120
        %v227 = vsel %vm226, %v218, 0.0
        %228 = vadd.xlane.f32.xlu0 %v227
        %v229 = vpop.xlane.xlu0 %228
        %v230 = vsel %vm226, %v219, 0.0
        %231 = vadd.xlane.f32.xlu0 %v230
        %v232 = vpop.xlane.xlu0 %231
        %v233 = vrcp.pop 32.0
        %v234 = vmul.f32 %v229, %v233
        %v235 = vmul.f32 %v232, %v233
        %v236 = vsub.f32 %v218, %v234
        %v237 = vsub.f32 %v219, %v235
        %v238 = vmul.f32 %v236, %v236
        %v239 = vmul.f32 %v237, %v237
        %v240 = vsel %vm226, %v238, 0.0
        %241 = vadd.xlane.f32.xlu0 %v240
        %v242 = vpop.xlane.xlu0 %241
        %v243 = vsel %vm226, %v239, 0.0
        %244 = vadd.xlane.f32.xlu0 %v243
        %v245 = vpop.xlane.xlu0 %244
        %v246 = vmul.f32 %v242, %v233
        %v247 = vmul.f32 %v245, %v233
        %v248 = vadd.f32 %v246, 1e-05
        %v249 = vadd.f32 %v247, 1e-05
        %v250 = vrsqrt.pop %v248
        %v251 = vrsqrt.pop %v249
        %v252 = vmul.f32 %v236, %v250
        %v253 = vmul.f32 %v237, %v251
        %v254 = vlaneseq
        %v255 = vshrl.u32 %v254, 7
        %v256 = vsub.s32 0, %v255
        %v257 = vrot.slane %v224, %v256
        %v258 = vmul.f32 %v252, %v257
        %v259 = vmul.f32 %v253, %v257
        %v260 = vlaneseq
        %v261 = vshrl.u32 %v260, 7
        %v262 = vsub.s32 0, %v261
        %v263 = vrot.slane %v225, %v262
        %v264 = vadd.f32 %v258, %v263
        %v265 = vadd.f32 %v259, %v263
        %v266 = vld [vmem:[#allocation5 + $0x50] sm:$0xff]
        %v267 = vld [vmem:[#allocation5 + $0x58] sm:$0xff]
        %v268 = vld [vmem:[#allocation5 + $0x60] sm:$0xff]
        %v269 = vld [vmem:[#allocation5 + $0x68] sm:$0xff]
        %v270 = vrot.slane %v264, 7
        %v271 = vrot.slane %v265, 7
        %vm272 = vcmp.lt.s32.totalorder %v222, 1
        %v273 = vsel %vm272, %v270, %v271
        %v274 = vsel %vm272, %v271, %v270
        %vm275 = vcmp.ge.s32.totalorder %v222, 1
        %vm276 = vcmp.ge.s32.totalorder %v223, 1
        %v277 = vsel %vm275, 1, 0
        %v278 = vsel %vm276, 1, 0
        %vm279 = vcmp.eq.s32.totalorder %v277, 1
        %vm280 = vcmp.eq.s32.totalorder %v278, 1
        %v281 = vsel %vm279, %v274, 0.0
        %v282 = vsel %vm280, %v273, 0.0
        %v283 = vld [vmem:[#allocation5 + $0x70] sm:$0xff]
        %v284 = vld [vmem:[#allocation5 + $0x78] sm:$0xff]
        %v285 = vld [vmem:[#allocation5 + $0x80] sm:$0xff]
        %v286 = vld [vmem:[#allocation5 + $0x88] sm:$0xff]
        %v288 = vsel %vm226, %v264, 0
        %v291 = vsel %vm226, %v265, 0
        %293 = vmatprep.subr.mxu0 0.0
        %294 = vmatpush1.msra.mxu0 0.0
        %295 = vmatprep.subr.mxu0 0.0
        %296 = vmatpush1.msra.mxu0 0.0
        %297 = vmatprep.subr.mxu0 0.0
        %298 = vmatpush1.msra.mxu0 0.0
        %299 = vmatprep.subr.mxu0 0.0
        %300 = vmatpush1.msra.mxu0 0.0
        %301 = vmatprep.subr.mxu0 0.0
        %302 = vmatpush1.msra.mxu0 0.0
        %303 = vmatprep.subr.mxu0 0.0
        %304 = vmatpush1.msra.mxu0 0.0
        %305 = vmatprep.subr.mxu0 0.0
        %306 = vmatpush1.msra.mxu0 0.0
        %307 = vmatprep.subr.mxu0 0.0
        %308 = vmatpush1.msra.mxu0 0.0
        %309 = vmatprep.subr.mxu0 0.0
        %310 = vmatpush1.msra.mxu0 0.0
        %311 = vmatprep.subr.mxu0 0.0
        %312 = vmatpush1.msra.mxu0 0.0
        %313 = vmatprep.subr.mxu0 0.0
        %314 = vmatpush1.msra.mxu0 0.0
        %315 = vmatprep.subr.mxu0 0.0
        %316 = vmatpush1.msra.mxu0 0.0
        %317 = vmatprep.subr.mxu0 0.0
        %318 = vmatpush1.msra.mxu0 %v286
        %319 = vmatprep.subr.mxu0 0.0
        %320 = vmatpush1.msra.mxu0 %v285
        %321 = vmatprep.subr.mxu0 0.0
        %322 = vmatpush1.msra.mxu0 %v284
        %323 = vmatprep.subr.mxu0 0.0
        %324 = vmatpush1.msra.mxu0 %v283
        %325 = vmatprep.subr.mxu0 0.0
        %326 = vmatpush2.msra.mxu0 0.0
        %327 = vmatprep.subr.mxu0 0.0
        %328 = vmatpush2.msra.mxu0 0.0
        %329 = vmatprep.subr.mxu0 0.0
        %330 = vmatpush2.msra.mxu0 0.0
        %331 = vmatprep.subr.mxu0 0.0
        %332 = vmatpush2.msra.mxu0 0.0
        %333 = vmatprep.subr.mxu0 0.0
        %334 = vmatpush2.msra.mxu0 0.0
        %335 = vmatprep.subr.mxu0 0.0
        %336 = vmatpush2.msra.mxu0 0.0
        %337 = vmatprep.subr.mxu0 0.0
        %338 = vmatpush2.msra.mxu0 0.0
        %339 = vmatprep.subr.mxu0 0.0
        %340 = vmatpush2.msra.mxu0 0.0
        %341 = vmatprep.subr.mxu0 0.0
        %342 = vmatpush2.msra.mxu0 0.0
        %343 = vmatprep.subr.mxu0 0.0
        %344 = vmatpush2.msra.mxu0 0.0
        %345 = vmatprep.subr.mxu0 0.0
        %346 = vmatpush2.msra.mxu0 0.0
        %347 = vmatprep.subr.mxu0 0.0
        %348 = vmatpush2.msra.mxu0 0.0
        %349 = vmatprep.subr.mxu0 0.0
        %350 = vmatpush2.msra.mxu0 0.0
        %351 = vmatprep.subr.mxu0 0.0
        %352 = vmatpush2.msra.mxu0 0.0
        %353 = vmatprep.subr.mxu0 0.0
        %354 = vmatpush2.msra.mxu0 0.0
        %355 = vmatprep.subr.mxu0 0.0
        %356 = vmatpush2.msra.mxu0 0.0
        %357 = vmatprep.mubr.f32.mxu0 0.0
        %358 = vmatmul.mubr.f32.gmra.mxu0 %v288
        %v359 = vpop.f32.mrf.mxu0
        %v360 = vadd.f32 0.0, %v359
        %v361 = vpop.f32.mrf.mxu0
        %362 = vmatprep.mubr.f32.mxu0 0.0
        %363 = vmatmul.mubr.f32.gmra.mxu0 %v291
        %v364 = vpop.f32.mrf.mxu0
        %v365 = vadd.f32 0.0, %v364
        %v366 = vpop.f32.mrf.mxu0
        %367 = vdwg.mxu0
        %v369 = vsel %vm226, %v281, 0
        %v372 = vsel %vm226, %v282, 0
        %374 = vmatprep.subr.mxu0 0.0
        %375 = vmatpush1.msra.mxu0 0.0
        %376 = vmatprep.subr.mxu0 0.0
        %377 = vmatpush1.msra.mxu0 0.0
        %378 = vmatprep.subr.mxu0 0.0
        %379 = vmatpush1.msra.mxu0 0.0
        %380 = vmatprep.subr.mxu0 0.0
        %381 = vmatpush1.msra.mxu0 0.0
        %382 = vmatprep.subr.mxu0 0.0
        %383 = vmatpush1.msra.mxu0 0.0
        %384 = vmatprep.subr.mxu0 0.0
        %385 = vmatpush1.msra.mxu0 0.0
        %386 = vmatprep.subr.mxu0 0.0
        %387 = vmatpush1.msra.mxu0 0.0
        %388 = vmatprep.subr.mxu0 0.0
        %389 = vmatpush1.msra.mxu0 0.0
        %390 = vmatprep.subr.mxu0 0.0
        %391 = vmatpush1.msra.mxu0 0.0
        %392 = vmatprep.subr.mxu0 0.0
        %393 = vmatpush1.msra.mxu0 0.0
        %394 = vmatprep.subr.mxu0 0.0
        %395 = vmatpush1.msra.mxu0 0.0
        %396 = vmatprep.subr.mxu0 0.0
        %397 = vmatpush1.msra.mxu0 0.0
        %398 = vmatprep.subr.mxu0 0.0
        %399 = vmatpush1.msra.mxu0 %v269
        %400 = vmatprep.subr.mxu0 0.0
        %401 = vmatpush1.msra.mxu0 %v268
        %402 = vmatprep.subr.mxu0 0.0
        %403 = vmatpush1.msra.mxu0 %v267
        %404 = vmatprep.subr.mxu0 0.0
        %405 = vmatpush1.msra.mxu0 %v266
        %406 = vmatprep.subr.mxu0 0.0
        %407 = vmatpush2.msra.mxu0 0.0
        %408 = vmatprep.subr.mxu0 0.0
        %409 = vmatpush2.msra.mxu0 0.0
        %410 = vmatprep.subr.mxu0 0.0
        %411 = vmatpush2.msra.mxu0 0.0
        %412 = vmatprep.subr.mxu0 0.0
        %413 = vmatpush2.msra.mxu0 0.0
        %414 = vmatprep.subr.mxu0 0.0
        %415 = vmatpush2.msra.mxu0 0.0
        %416 = vmatprep.subr.mxu0 0.0
        %417 = vmatpush2.msra.mxu0 0.0
        %418 = vmatprep.subr.mxu0 0.0
        %419 = vmatpush2.msra.mxu0 0.0
        %420 = vmatprep.subr.mxu0 0.0
        %421 = vmatpush2.msra.mxu0 0.0
        %422 = vmatprep.subr.mxu0 0.0
        %423 = vmatpush2.msra.mxu0 0.0
        %424 = vmatprep.subr.mxu0 0.0
        %425 = vmatpush2.msra.mxu0 0.0
        %426 = vmatprep.subr.mxu0 0.0
        %427 = vmatpush2.msra.mxu0 0.0
        %428 = vmatprep.subr.mxu0 0.0
        %429 = vmatpush2.msra.mxu0 0.0
        %430 = vmatprep.subr.mxu0 0.0
        %431 = vmatpush2.msra.mxu0 0.0
        %432 = vmatprep.subr.mxu0 0.0
        %433 = vmatpush2.msra.mxu0 0.0
        %434 = vmatprep.subr.mxu0 0.0
        %435 = vmatpush2.msra.mxu0 0.0
        %436 = vmatprep.subr.mxu0 0.0
        %437 = vmatpush2.msra.mxu0 0.0
        %438 = vmatprep.mubr.f32.mxu0 0.0
        %439 = vmatmul.mubr.f32.gmra.mxu0 %v369
        %v440 = vpop.f32.mrf.mxu0
        %v441 = vadd.f32 %v360, %v440
        %v442 = vpop.f32.mrf.mxu0
        %443 = vmatprep.mubr.f32.mxu0 0.0
        %444 = vmatmul.mubr.f32.gmra.mxu0 %v372
        %v445 = vpop.f32.mrf.mxu0
        %v446 = vadd.f32 %v365, %v445
        %v447 = vpop.f32.mrf.mxu0
        %448 = vdwg.mxu0
        %v449 = vld [vmem:[#allocation5 + $0x90] sm:$0xff]
        %v450 = vld [vmem:[#allocation5 + $0x98] sm:$0xff]
        %v451 = vld [vmem:[#allocation5 + $0xa0] sm:$0xff]
        %v452 = vld [vmem:[#allocation5 + $0xa8] sm:$0xff]
        %v453 = vrot.slane %v264, 1
        %v454 = vrot.slane %v265, 1
        %vm455 = vcmp.lt.s32.totalorder %v222, 7
        %v456 = vsel %vm455, %v453, %v454
        %v457 = vsel %vm455, %v454, %v453
        %vm458 = vcmp.lt.s32.totalorder %v222, 15
        %vm459 = vcmp.lt.s32.totalorder %v223, 15
        %v460 = vsel %vm458, 1, 0
        %v461 = vsel %vm459, 1, 0
        %vm462 = vcmp.eq.s32.totalorder %v460, 1
        %vm463 = vcmp.eq.s32.totalorder %v461, 1
        %v464 = vsel %vm462, %v456, 0.0
        %v465 = vsel %vm463, %v457, 0.0
        %v467 = vsel %vm226, %v464, 0
        %v470 = vsel %vm226, %v465, 0
        %472 = vmatprep.subr.mxu0 0.0
        %473 = vmatpush1.msra.mxu0 0.0
        %474 = vmatprep.subr.mxu0 0.0
        %475 = vmatpush1.msra.mxu0 0.0
        %476 = vmatprep.subr.mxu0 0.0
        %477 = vmatpush1.msra.mxu0 0.0
        %478 = vmatprep.subr.mxu0 0.0
        %479 = vmatpush1.msra.mxu0 0.0
        %480 = vmatprep.subr.mxu0 0.0
        %481 = vmatpush1.msra.mxu0 0.0
        %482 = vmatprep.subr.mxu0 0.0
        %483 = vmatpush1.msra.mxu0 0.0
        %484 = vmatprep.subr.mxu0 0.0
        %485 = vmatpush1.msra.mxu0 0.0
        %486 = vmatprep.subr.mxu0 0.0
        %487 = vmatpush1.msra.mxu0 0.0
        %488 = vmatprep.subr.mxu0 0.0
        %489 = vmatpush1.msra.mxu0 0.0
        %490 = vmatprep.subr.mxu0 0.0
        %491 = vmatpush1.msra.mxu0 0.0
        %492 = vmatprep.subr.mxu0 0.0
        %493 = vmatpush1.msra.mxu0 0.0
        %494 = vmatprep.subr.mxu0 0.0
        %495 = vmatpush1.msra.mxu0 0.0
        %496 = vmatprep.subr.mxu0 0.0
        %497 = vmatpush1.msra.mxu0 %v452
        %498 = vmatprep.subr.mxu0 0.0
        %499 = vmatpush1.msra.mxu0 %v451
        %500 = vmatprep.subr.mxu0 0.0
        %501 = vmatpush1.msra.mxu0 %v450
        %502 = vmatprep.subr.mxu0 0.0
        %503 = vmatpush1.msra.mxu0 %v449
        %504 = vmatprep.subr.mxu0 0.0
        %505 = vmatpush2.msra.mxu0 0.0
        %506 = vmatprep.subr.mxu0 0.0
        %507 = vmatpush2.msra.mxu0 0.0
        %508 = vmatprep.subr.mxu0 0.0
        %509 = vmatpush2.msra.mxu0 0.0
        %510 = vmatprep.subr.mxu0 0.0
        %511 = vmatpush2.msra.mxu0 0.0
        %512 = vmatprep.subr.mxu0 0.0
        %513 = vmatpush2.msra.mxu0 0.0
        %514 = vmatprep.subr.mxu0 0.0
        %515 = vmatpush2.msra.mxu0 0.0
        %516 = vmatprep.subr.mxu0 0.0
        %517 = vmatpush2.msra.mxu0 0.0
        %518 = vmatprep.subr.mxu0 0.0
        %519 = vmatpush2.msra.mxu0 0.0
        %520 = vmatprep.subr.mxu0 0.0
        %521 = vmatpush2.msra.mxu0 0.0
        %522 = vmatprep.subr.mxu0 0.0
        %523 = vmatpush2.msra.mxu0 0.0
        %524 = vmatprep.subr.mxu0 0.0
        %525 = vmatpush2.msra.mxu0 0.0
        %526 = vmatprep.subr.mxu0 0.0
        %527 = vmatpush2.msra.mxu0 0.0
        %528 = vmatprep.subr.mxu0 0.0
        %529 = vmatpush2.msra.mxu0 0.0
        %530 = vmatprep.subr.mxu0 0.0
        %531 = vmatpush2.msra.mxu0 0.0
        %532 = vmatprep.subr.mxu0 0.0
        %533 = vmatpush2.msra.mxu0 0.0
        %534 = vmatprep.subr.mxu0 0.0
        %535 = vmatpush2.msra.mxu0 0.0
        %536 = vmatprep.mubr.f32.mxu0 0.0
        %537 = vmatmul.mubr.f32.gmra.mxu0 %v467
        %v538 = vpop.f32.mrf.mxu0
        %v539 = vadd.f32 0.0, %v538
        %v540 = vpop.f32.mrf.mxu0
        %541 = vmatprep.mubr.f32.mxu0 0.0
        %542 = vmatmul.mubr.f32.gmra.mxu0 %v470
        %v543 = vpop.f32.mrf.mxu0
        %v544 = vadd.f32 0.0, %v543
        %v545 = vpop.f32.mrf.mxu0
        %546 = vdwg.mxu0
        %v547 = vadd.f32 %v441, %v539
        %v548 = vadd.f32 %v446, %v544
        %v549 = vld [vmem:[#allocation5 + $0xb0] sm:$0x1]
        %v550 = vlaneseq
        %v551 = vshrl.u32 %v550, 7
        %v552 = vsub.s32 0, %v551
        %v553 = vrot.slane %v549, %v552
        %v554 = vadd.f32 %v547, %v553
        %v555 = vadd.f32 %v548, %v553
        %v556 = vxor.u32 %v554, 2147483648
        %v557 = vxor.u32 %v555, 2147483648
        %v558 = vmul.f32 %v556, 1.442695
        %v559 = vpow.pop %v558
        %v560 = vmul.f32 %v557, 1.442695
        %v561 = vpow.pop %v560
        %v562 = vadd.f32 %v559, 1.0
        %v563 = vadd.f32 %v561, 1.0
        %v564 = vrcp.pop %v562
        %v565 = vmul.f32 1.0, %v564
        %v566 = vrcp.pop %v563
        %v567 = vmul.f32 1.0, %v566
        %570 = vrot.lane.b32.xlu0 %v565, 96
        %v571 = vpop.permute.xlu0 %570
        %572 = vrot.lane.b32.xlu0 %v567, 96
        %v573 = vpop.permute.xlu0 %572
        %v576 = vmul.f32 %v554, %v571
        %v577 = vmul.f32 %v555, %v573
        %v578 = vld [vmem:[#allocation5 + $0x10] sm:$0x1]
        %v579 = vld [vmem:[#allocation5 + $0x18] sm:$0x1]
        %v580 = vsel %vm226, %v576, 0.0
        %581 = vadd.xlane.f32.xlu0 %v580
        %v582 = vpop.xlane.xlu0 %581
        %v583 = vsel %vm226, %v577, 0.0
        %584 = vadd.xlane.f32.xlu0 %v583
        %v585 = vpop.xlane.xlu0 %584
        %v586 = vmul.f32 %v582, %v233
        %v587 = vmul.f32 %v585, %v233
        %v588 = vsub.f32 %v576, %v586
        %v589 = vsub.f32 %v577, %v587
        %v590 = vmul.f32 %v588, %v588
        %v591 = vmul.f32 %v589, %v589
        %v592 = vsel %vm226, %v590, 0.0
        %593 = vadd.xlane.f32.xlu0 %v592
        %v594 = vpop.xlane.xlu0 %593
        %v595 = vsel %vm226, %v591, 0.0
        %596 = vadd.xlane.f32.xlu0 %v595
        %v597 = vpop.xlane.xlu0 %596
        %v598 = vmul.f32 %v594, %v233
        %v599 = vmul.f32 %v597, %v233
        %v600 = vadd.f32 %v598, 1e-05
        %v601 = vadd.f32 %v599, 1e-05
        %v602 = vrsqrt.pop %v600
        %v603 = vrsqrt.pop %v601
        %v604 = vmul.f32 %v588, %v602
        %v605 = vmul.f32 %v589, %v603
        %v606 = vlaneseq
        %v607 = vshrl.u32 %v606, 7
        %v608 = vsub.s32 0, %v607
        %v609 = vrot.slane %v578, %v608
        %v610 = vmul.f32 %v604, %v609
        %v611 = vmul.f32 %v605, %v609
        %v612 = vlaneseq
        %v613 = vshrl.u32 %v612, 7
        %v614 = vsub.s32 0, %v613
        %v615 = vrot.slane %v579, %v614
        %v616 = vadd.f32 %v610, %v615
        %v617 = vadd.f32 %v611, %v615
        %v618 = vld [vmem:[#allocation5 + $0xb8] sm:$0xff]
        %v619 = vld [vmem:[#allocation5 + $0xc0] sm:$0xff]
        %v620 = vld [vmem:[#allocation5 + $0xc8] sm:$0xff]
        %v621 = vld [vmem:[#allocation5 + $0xd0] sm:$0xff]
        %v622 = vld [vmem:[#allocation5 + $0xd8] sm:$0x1]
        %v623 = vlaneseq
        %v624 = vshrl.u32 %v623, 7
        %v625 = vsub.s32 0, %v624
        %v626 = vrot.slane %v622, %v625
        %v628 = vsel %vm226, %v616, 0
        %v631 = vsel %vm226, %v617, 0
        %633 = vmatprep.subr.mxu0 0.0
        %634 = vmatpush1.msra.mxu0 0.0
        %635 = vmatprep.subr.mxu0 0.0
        %636 = vmatpush1.msra.mxu0 0.0
        %637 = vmatprep.subr.mxu0 0.0
        %638 = vmatpush1.msra.mxu0 0.0
        %639 = vmatprep.subr.mxu0 0.0
        %640 = vmatpush1.msra.mxu0 0.0
        %641 = vmatprep.subr.mxu0 0.0
        %642 = vmatpush1.msra.mxu0 0.0
        %643 = vmatprep.subr.mxu0 0.0
        %644 = vmatpush1.msra.mxu0 0.0
        %645 = vmatprep.subr.mxu0 0.0
        %646 = vmatpush1.msra.mxu0 0.0
        %647 = vmatprep.subr.mxu0 0.0
        %648 = vmatpush1.msra.mxu0 0.0
        %649 = vmatprep.subr.mxu0 0.0
        %650 = vmatpush1.msra.mxu0 0.0
        %651 = vmatprep.subr.mxu0 0.0
        %652 = vmatpush1.msra.mxu0 0.0
        %653 = vmatprep.subr.mxu0 0.0
        %654 = vmatpush1.msra.mxu0 0.0
        %655 = vmatprep.subr.mxu0 0.0
        %656 = vmatpush1.msra.mxu0 0.0
        %657 = vmatprep.subr.mxu0 0.0
        %658 = vmatpush1.msra.mxu0 %v621
        %659 = vmatprep.subr.mxu0 0.0
        %660 = vmatpush1.msra.mxu0 %v620
        %661 = vmatprep.subr.mxu0 0.0
        %662 = vmatpush1.msra.mxu0 %v619
        %663 = vmatprep.subr.mxu0 0.0
        %664 = vmatpush1.msra.mxu0 %v618
        %665 = vmatprep.subr.mxu0 0.0
        %666 = vmatpush2.msra.mxu0 0.0
        %667 = vmatprep.subr.mxu0 0.0
        %668 = vmatpush2.msra.mxu0 0.0
        %669 = vmatprep.subr.mxu0 0.0
        %670 = vmatpush2.msra.mxu0 0.0
        %671 = vmatprep.subr.mxu0 0.0
        %672 = vmatpush2.msra.mxu0 0.0
        %673 = vmatprep.subr.mxu0 0.0
        %674 = vmatpush2.msra.mxu0 0.0
        %675 = vmatprep.subr.mxu0 0.0
        %676 = vmatpush2.msra.mxu0 0.0
        %677 = vmatprep.subr.mxu0 0.0
        %678 = vmatpush2.msra.mxu0 0.0
        %679 = vmatprep.subr.mxu0 0.0
        %680 = vmatpush2.msra.mxu0 0.0
        %681 = vmatprep.subr.mxu0 0.0
        %682 = vmatpush2.msra.mxu0 0.0
        %683 = vmatprep.subr.mxu0 0.0
        %684 = vmatpush2.msra.mxu0 0.0
        %685 = vmatprep.subr.mxu0 0.0
        %686 = vmatpush2.msra.mxu0 0.0
        %687 = vmatprep.subr.mxu0 0.0
        %688 = vmatpush2.msra.mxu0 0.0
        %689 = vmatprep.subr.mxu0 0.0
        %690 = vmatpush2.msra.mxu0 0.0
        %691 = vmatprep.subr.mxu0 0.0
        %692 = vmatpush2.msra.mxu0 0.0
        %693 = vmatprep.subr.mxu0 0.0
        %694 = vmatpush2.msra.mxu0 0.0
        %695 = vmatprep.subr.mxu0 0.0
        %696 = vmatpush2.msra.mxu0 0.0
        %697 = vmatprep.mubr.f32.mxu0 0.0
        %698 = vmatmul.mubr.f32.gmra.mxu0 %v628
        %v699 = vpop.f32.mrf.mxu0
        %v700 = vadd.f32 %v626, %v699
        %v701 = vpop.f32.mrf.mxu0
        %702 = vmatprep.mubr.f32.mxu0 0.0
        %703 = vmatmul.mubr.f32.gmra.mxu0 %v631
        %v704 = vpop.f32.mrf.mxu0
        %v705 = vadd.f32 %v626, %v704
        %v706 = vpop.f32.mrf.mxu0
        %707 = vdwg.mxu0
        %v708 = vmax.f32 %v700, 0.0
        %v709 = vmax.f32 %v705, 0.0
        %v710 = vld [vmem:[#allocation5 + $0xe0] sm:$0xff]
        %v711 = vld [vmem:[#allocation5 + $0xe8] sm:$0xff]
        %v712 = vld [vmem:[#allocation5 + $0xf0] sm:$0xff]
        %v713 = vld [vmem:[#allocation5 + $0xf8] sm:$0xff]
        %v714 = vrot.slane %v616, 7
        %v715 = vrot.slane %v617, 7
        %v716 = vsel %vm272, %v714, %v715
        %v717 = vsel %vm272, %v715, %v714
        %v718 = vsel %vm279, %v717, 0.0
        %v719 = vsel %vm280, %v716, 0.0
        %v720 = vld [vmem:[#allocation5 + $0x100] sm:$0xff]
        %v721 = vld [vmem:[#allocation5 + $0x108] sm:$0xff]
        %v722 = vld [vmem:[#allocation5 + $0x110] sm:$0xff]
        %v723 = vld [vmem:[#allocation5 + $0x118] sm:$0xff]
        %724 = vmatprep.subr.mxu0 0.0
        %725 = vmatpush1.msra.mxu0 0.0
        %726 = vmatprep.subr.mxu0 0.0
        %727 = vmatpush1.msra.mxu0 0.0
        %728 = vmatprep.subr.mxu0 0.0
        %729 = vmatpush1.msra.mxu0 0.0
        %730 = vmatprep.subr.mxu0 0.0
        %731 = vmatpush1.msra.mxu0 0.0
        %732 = vmatprep.subr.mxu0 0.0
        %733 = vmatpush1.msra.mxu0 0.0
        %734 = vmatprep.subr.mxu0 0.0
        %735 = vmatpush1.msra.mxu0 0.0
        %736 = vmatprep.subr.mxu0 0.0
        %737 = vmatpush1.msra.mxu0 0.0
        %738 = vmatprep.subr.mxu0 0.0
        %739 = vmatpush1.msra.mxu0 0.0
        %740 = vmatprep.subr.mxu0 0.0
        %741 = vmatpush1.msra.mxu0 0.0
        %742 = vmatprep.subr.mxu0 0.0
        %743 = vmatpush1.msra.mxu0 0.0
        %744 = vmatprep.subr.mxu0 0.0
        %745 = vmatpush1.msra.mxu0 0.0
        %746 = vmatprep.subr.mxu0 0.0
        %747 = vmatpush1.msra.mxu0 0.0
        %748 = vmatprep.subr.mxu0 0.0
        %749 = vmatpush1.msra.mxu0 %v723
        %750 = vmatprep.subr.mxu0 0.0
        %751 = vmatpush1.msra.mxu0 %v722
        %752 = vmatprep.subr.mxu0 0.0
        %753 = vmatpush1.msra.mxu0 %v721
        %754 = vmatprep.subr.mxu0 0.0
        %755 = vmatpush1.msra.mxu0 %v720
        %756 = vmatprep.subr.mxu0 0.0
        %757 = vmatpush2.msra.mxu0 0.0
        %758 = vmatprep.subr.mxu0 0.0
        %759 = vmatpush2.msra.mxu0 0.0
        %760 = vmatprep.subr.mxu0 0.0
        %761 = vmatpush2.msra.mxu0 0.0
        %762 = vmatprep.subr.mxu0 0.0
        %763 = vmatpush2.msra.mxu0 0.0
        %764 = vmatprep.subr.mxu0 0.0
        %765 = vmatpush2.msra.mxu0 0.0
        %766 = vmatprep.subr.mxu0 0.0
        %767 = vmatpush2.msra.mxu0 0.0
        %768 = vmatprep.subr.mxu0 0.0
        %769 = vmatpush2.msra.mxu0 0.0
        %770 = vmatprep.subr.mxu0 0.0
        %771 = vmatpush2.msra.mxu0 0.0
        %772 = vmatprep.subr.mxu0 0.0
        %773 = vmatpush2.msra.mxu0 0.0
        %774 = vmatprep.subr.mxu0 0.0
        %775 = vmatpush2.msra.mxu0 0.0
        %776 = vmatprep.subr.mxu0 0.0
        %777 = vmatpush2.msra.mxu0 0.0
        %778 = vmatprep.subr.mxu0 0.0
        %779 = vmatpush2.msra.mxu0 0.0
        %780 = vmatprep.subr.mxu0 0.0
        %781 = vmatpush2.msra.mxu0 0.0
        %782 = vmatprep.subr.mxu0 0.0
        %783 = vmatpush2.msra.mxu0 0.0
        %784 = vmatprep.subr.mxu0 0.0
        %785 = vmatpush2.msra.mxu0 0.0
        %786 = vmatprep.subr.mxu0 0.0
        %787 = vmatpush2.msra.mxu0 0.0
        %788 = vmatprep.mubr.f32.mxu0 0.0
        %789 = vmatmul.mubr.f32.gmra.mxu0 %v628
        %v790 = vpop.f32.mrf.mxu0
        %v791 = vadd.f32 0.0, %v790
        %v792 = vpop.f32.mrf.mxu0
        %793 = vmatprep.mubr.f32.mxu0 0.0
        %794 = vmatmul.mubr.f32.gmra.mxu0 %v631
        %v795 = vpop.f32.mrf.mxu0
        %v796 = vadd.f32 0.0, %v795
        %v797 = vpop.f32.mrf.mxu0
        %798 = vdwg.mxu0
        %v800 = vsel %vm226, %v718, 0
        %v803 = vsel %vm226, %v719, 0
        %805 = vmatprep.subr.mxu0 0.0
        %806 = vmatpush1.msra.mxu0 0.0
        %807 = vmatprep.subr.mxu0 0.0
        %808 = vmatpush1.msra.mxu0 0.0
        %809 = vmatprep.subr.mxu0 0.0
        %810 = vmatpush1.msra.mxu0 0.0
        %811 = vmatprep.subr.mxu0 0.0
        %812 = vmatpush1.msra.mxu0 0.0
        %813 = vmatprep.subr.mxu0 0.0
        %814 = vmatpush1.msra.mxu0 0.0
        %815 = vmatprep.subr.mxu0 0.0
        %816 = vmatpush1.msra.mxu0 0.0
        %817 = vmatprep.subr.mxu0 0.0
        %818 = vmatpush1.msra.mxu0 0.0
        %819 = vmatprep.subr.mxu0 0.0
        %820 = vmatpush1.msra.mxu0 0.0
        %821 = vmatprep.subr.mxu0 0.0
        %822 = vmatpush1.msra.mxu0 0.0
        %823 = vmatprep.subr.mxu0 0.0
        %824 = vmatpush1.msra.mxu0 0.0
        %825 = vmatprep.subr.mxu0 0.0
        %826 = vmatpush1.msra.mxu0 0.0
        %827 = vmatprep.subr.mxu0 0.0
        %828 = vmatpush1.msra.mxu0 0.0
        %829 = vmatprep.subr.mxu0 0.0
        %830 = vmatpush1.msra.mxu0 %v713
        %831 = vmatprep.subr.mxu0 0.0
        %832 = vmatpush1.msra.mxu0 %v712
        %833 = vmatprep.subr.mxu0 0.0
        %834 = vmatpush1.msra.mxu0 %v711
        %835 = vmatprep.subr.mxu0 0.0
        %836 = vmatpush1.msra.mxu0 %v710
        %837 = vmatprep.subr.mxu0 0.0
        %838 = vmatpush2.msra.mxu0 0.0
        %839 = vmatprep.subr.mxu0 0.0
        %840 = vmatpush2.msra.mxu0 0.0
        %841 = vmatprep.subr.mxu0 0.0
        %842 = vmatpush2.msra.mxu0 0.0
        %843 = vmatprep.subr.mxu0 0.0
        %844 = vmatpush2.msra.mxu0 0.0
        %845 = vmatprep.subr.mxu0 0.0
        %846 = vmatpush2.msra.mxu0 0.0
        %847 = vmatprep.subr.mxu0 0.0
        %848 = vmatpush2.msra.mxu0 0.0
        %849 = vmatprep.subr.mxu0 0.0
        %850 = vmatpush2.msra.mxu0 0.0
        %851 = vmatprep.subr.mxu0 0.0
        %852 = vmatpush2.msra.mxu0 0.0
        %853 = vmatprep.subr.mxu0 0.0
        %854 = vmatpush2.msra.mxu0 0.0
        %855 = vmatprep.subr.mxu0 0.0
        %856 = vmatpush2.msra.mxu0 0.0
        %857 = vmatprep.subr.mxu0 0.0
        %858 = vmatpush2.msra.mxu0 0.0
        %859 = vmatprep.subr.mxu0 0.0
        %860 = vmatpush2.msra.mxu0 0.0
        %861 = vmatprep.subr.mxu0 0.0
        %862 = vmatpush2.msra.mxu0 0.0
        %863 = vmatprep.subr.mxu0 0.0
        %864 = vmatpush2.msra.mxu0 0.0
        %865 = vmatprep.subr.mxu0 0.0
        %866 = vmatpush2.msra.mxu0 0.0
        %867 = vmatprep.subr.mxu0 0.0
        %868 = vmatpush2.msra.mxu0 0.0
        %869 = vmatprep.mubr.f32.mxu0 0.0
        %870 = vmatmul.mubr.f32.gmra.mxu0 %v800
        %v871 = vpop.f32.mrf.mxu0
        %v872 = vadd.f32 %v791, %v871
        %v873 = vpop.f32.mrf.mxu0
        %874 = vmatprep.mubr.f32.mxu0 0.0
        %875 = vmatmul.mubr.f32.gmra.mxu0 %v803
        %v876 = vpop.f32.mrf.mxu0
        %v877 = vadd.f32 %v796, %v876
        %v878 = vpop.f32.mrf.mxu0
        %879 = vdwg.mxu0
        %v880 = vld [vmem:[#allocation5 + $0x120] sm:$0xff]
        %v881 = vld [vmem:[#allocation5 + $0x128] sm:$0xff]
        %v882 = vld [vmem:[#allocation5 + $0x130] sm:$0xff]
        %v883 = vld [vmem:[#allocation5 + $0x138] sm:$0xff]
        %v884 = vrot.slane %v616, 1
        %v885 = vrot.slane %v617, 1
        %v886 = vsel %vm455, %v884, %v885
        %v887 = vsel %vm455, %v885, %v884
        %v888 = vsel %vm462, %v886, 0.0
        %v889 = vsel %vm463, %v887, 0.0
        %v891 = vsel %vm226, %v888, 0
        %v894 = vsel %vm226, %v889, 0
        %896 = vmatprep.subr.mxu0 0.0
        %897 = vmatpush1.msra.mxu0 0.0
        %898 = vmatprep.subr.mxu0 0.0
        %899 = vmatpush1.msra.mxu0 0.0
        %900 = vmatprep.subr.mxu0 0.0
        %901 = vmatpush1.msra.mxu0 0.0
        %902 = vmatprep.subr.mxu0 0.0
        %903 = vmatpush1.msra.mxu0 0.0
        %904 = vmatprep.subr.mxu0 0.0
        %905 = vmatpush1.msra.mxu0 0.0
        %906 = vmatprep.subr.mxu0 0.0
        %907 = vmatpush1.msra.mxu0 0.0
        %908 = vmatprep.subr.mxu0 0.0
        %909 = vmatpush1.msra.mxu0 0.0
        %910 = vmatprep.subr.mxu0 0.0
        %911 = vmatpush1.msra.mxu0 0.0
        %912 = vmatprep.subr.mxu0 0.0
        %913 = vmatpush1.msra.mxu0 0.0
        %914 = vmatprep.subr.mxu0 0.0
        %915 = vmatpush1.msra.mxu0 0.0
        %916 = vmatprep.subr.mxu0 0.0
        %917 = vmatpush1.msra.mxu0 0.0
        %918 = vmatprep.subr.mxu0 0.0
        %919 = vmatpush1.msra.mxu0 0.0
        %920 = vmatprep.subr.mxu0 0.0
        %921 = vmatpush1.msra.mxu0 %v883
        %922 = vmatprep.subr.mxu0 0.0
        %923 = vmatpush1.msra.mxu0 %v882
        %924 = vmatprep.subr.mxu0 0.0
        %925 = vmatpush1.msra.mxu0 %v881
        %926 = vmatprep.subr.mxu0 0.0
        %927 = vmatpush1.msra.mxu0 %v880
        %928 = vmatprep.subr.mxu0 0.0
        %929 = vmatpush2.msra.mxu0 0.0
        %930 = vmatprep.subr.mxu0 0.0
        %931 = vmatpush2.msra.mxu0 0.0
        %932 = vmatprep.subr.mxu0 0.0
        %933 = vmatpush2.msra.mxu0 0.0
        %934 = vmatprep.subr.mxu0 0.0
        %935 = vmatpush2.msra.mxu0 0.0
        %936 = vmatprep.subr.mxu0 0.0
        %937 = vmatpush2.msra.mxu0 0.0
        %938 = vmatprep.subr.mxu0 0.0
        %939 = vmatpush2.msra.mxu0 0.0
        %940 = vmatprep.subr.mxu0 0.0
        %941 = vmatpush2.msra.mxu0 0.0
        %942 = vmatprep.subr.mxu0 0.0
        %943 = vmatpush2.msra.mxu0 0.0
        %944 = vmatprep.subr.mxu0 0.0
        %945 = vmatpush2.msra.mxu0 0.0
        %946 = vmatprep.subr.mxu0 0.0
        %947 = vmatpush2.msra.mxu0 0.0
        %948 = vmatprep.subr.mxu0 0.0
        %949 = vmatpush2.msra.mxu0 0.0
        %950 = vmatprep.subr.mxu0 0.0
        %951 = vmatpush2.msra.mxu0 0.0
        %952 = vmatprep.subr.mxu0 0.0
        %953 = vmatpush2.msra.mxu0 0.0
        %954 = vmatprep.subr.mxu0 0.0
        %955 = vmatpush2.msra.mxu0 0.0
        %956 = vmatprep.subr.mxu0 0.0
        %957 = vmatpush2.msra.mxu0 0.0
        %958 = vmatprep.subr.mxu0 0.0
        %959 = vmatpush2.msra.mxu0 0.0
        %960 = vmatprep.mubr.f32.mxu0 0.0
        %961 = vmatmul.mubr.f32.gmra.mxu0 %v891
        %v962 = vpop.f32.mrf.mxu0
        %v963 = vadd.f32 0.0, %v962
        %v964 = vpop.f32.mrf.mxu0
        %965 = vmatprep.mubr.f32.mxu0 0.0
        %966 = vmatmul.mubr.f32.gmra.mxu0 %v894
        %v967 = vpop.f32.mrf.mxu0
        %v968 = vadd.f32 0.0, %v967
        %v969 = vpop.f32.mrf.mxu0
        %970 = vdwg.mxu0
        %v971 = vadd.f32 %v872, %v963
        %v972 = vadd.f32 %v877, %v968
        %v973 = vld [vmem:[#allocation5 + $0x140] sm:$0x1]
        %v974 = vlaneseq
        %v975 = vshrl.u32 %v974, 7
        %v976 = vsub.s32 0, %v975
        %v977 = vrot.slane %v973, %v976
        %v978 = vadd.f32 %v971, %v977
        %v979 = vadd.f32 %v972, %v977
        %v980 = vmax.f32 %v978, 0.0
        %v981 = vmax.f32 %v979, 0.0
        %v982 = vadd.f32 %v708, %v980
        %v983 = vadd.f32 %v709, %v981
        %v984 = vld [vmem:[#allocation5 + $0x40] sm:$0x1]
        %v985 = vld [vmem:[#allocation5 + $0x48] sm:$0x1]
        %vm986 = vcmask 523264
        %v987 = vsel %vm986, %v982, 0.0
        %988 = vadd.xlane.f32.xlu0 %v987
        %v989 = vpop.xlane.xlu0 %988
        %v990 = vsel %vm986, %v983, 0.0
        %991 = vadd.xlane.f32.xlu0 %v990
        %v992 = vpop.xlane.xlu0 %991
        %v993 = vrcp.pop 64.0
        %v994 = vmul.f32 %v989, %v993
        %v995 = vmul.f32 %v992, %v993
        %v996 = vsub.f32 %v982, %v994
        %v997 = vsub.f32 %v983, %v995
        %v998 = vmul.f32 %v996, %v996
        %v999 = vmul.f32 %v997, %v997
        %v1000 = vsel %vm986, %v998, 0.0
        %1001 = vadd.xlane.f32.xlu0 %v1000
        %v1002 = vpop.xlane.xlu0 %1001
        %v1003 = vsel %vm986, %v999, 0.0
        %1004 = vadd.xlane.f32.xlu0 %v1003
        %v1005 = vpop.xlane.xlu0 %1004
        %v1006 = vmul.f32 %v1002, %v993
        %v1007 = vmul.f32 %v1005, %v993
        %v1008 = vadd.f32 %v1006, 1e-05
        %v1009 = vadd.f32 %v1007, 1e-05
        %v1010 = vrsqrt.pop %v1008
        %v1011 = vrsqrt.pop %v1009
        %v1012 = vmul.f32 %v996, %v1010
        %v1013 = vmul.f32 %v997, %v1011
        %v1014 = vlaneseq
        %v1015 = vshrl.u32 %v1014, 7
        %v1016 = vsub.s32 0, %v1015
        %v1017 = vrot.slane %v984, %v1016
        %v1018 = vmul.f32 %v1012, %v1017
        %v1019 = vmul.f32 %v1013, %v1017
        %v1020 = vlaneseq
        %v1021 = vshrl.u32 %v1020, 7
        %v1022 = vsub.s32 0, %v1021
        %v1023 = vrot.slane %v985, %v1022
        %v1024 = vadd.f32 %v1018, %v1023
        %v1025 = vadd.f32 %v1019, %v1023
        %v1026 = vld [vmem:[#allocation5 + $0x148] sm:$0xff]
        %v1027 = vld [vmem:[#allocation5 + $0x150] sm:$0x1]
        %v1028 = vrot.slane %v1024, 4
        %v1029 = vrot.slane %v1025, 4
        %vm1030 = vcmp.lt.s32.totalorder %v222, 4
        %v1031 = vsel %vm1030, %v1028, %v1029
        %v1032 = vsel %vm1030, %v1029, %v1028
        %vm1033 = vcmp.ge.s32.totalorder %v222, 4
        %vm1034 = vcmp.ge.s32.totalorder %v223, 4
        %v1035 = vsel %vm1033, 1, 0
        %v1036 = vsel %vm1034, 1, 0
        %vm1037 = vcmp.eq.s32.totalorder %v1035, 1
        %vm1038 = vcmp.eq.s32.totalorder %v1036, 1
        %v1039 = vsel %vm1037, %v1032, 0.0
        %v1040 = vsel %vm1038, %v1031, 0.0
        %v1041 = vlaneseq
        %v1042 = vshrl.u32 %v1041, 7
        %v1043 = vsub.s32 0, %v1042
        %v1044 = vrot.slane %v1026, %v1043
        %v1045 = vmul.f32 %v1039, %v1044
        %v1046 = vmul.f32 %v1040, %v1044
        %v1047 = vadd.f32 %v1045, 0.0
        %v1048 = vadd.f32 %v1046, 0.0
        %v1049 = vrot.slane %v1024, 5
        %v1050 = vrot.slane %v1025, 5
        %vm1051 = vcmp.lt.s32.totalorder %v222, 3
        %v1052 = vsel %vm1051, %v1049, %v1050
        %v1053 = vsel %vm1051, %v1050, %v1049
        %vm1054 = vcmp.ge.s32.totalorder %v222, 3
        %vm1055 = vcmp.ge.s32.totalorder %v223, 3
        %v1056 = vsel %vm1054, 1, 0
        %v1057 = vsel %vm1055, 1, 0
        %vm1058 = vcmp.eq.s32.totalorder %v1056, 1
        %vm1059 = vcmp.eq.s32.totalorder %v1057, 1
        %v1060 = vsel %vm1058, %v1053, 0.0
        %v1061 = vsel %vm1059, %v1052, 0.0
        %v1062 = vlaneseq
        %v1063 = vshrl.u32 %v1062, 7
        %v1064 = vsub.s32 1, %v1063
        %v1065 = vrot.slane %v1026, %v1064
        %v1066 = vmul.f32 %v1060, %v1065
        %v1067 = vmul.f32 %v1061, %v1065
        %v1068 = vadd.f32 %v1047, %v1066
        %v1069 = vadd.f32 %v1048, %v1067
        %v1070 = vrot.slane %v1024, 6
        %v1071 = vrot.slane %v1025, 6
        %vm1072 = vcmp.lt.s32.totalorder %v222, 2
        %v1073 = vsel %vm1072, %v1070, %v1071
        %v1074 = vsel %vm1072, %v1071, %v1070
        %vm1075 = vcmp.ge.s32.totalorder %v222, 2
        %vm1076 = vcmp.ge.s32.totalorder %v223, 2
        %v1077 = vsel %vm1075, 1, 0
        %v1078 = vsel %vm1076, 1, 0
        %vm1079 = vcmp.eq.s32.totalorder %v1077, 1
        %vm1080 = vcmp.eq.s32.totalorder %v1078, 1
        %v1081 = vsel %vm1079, %v1074, 0.0
        %v1082 = vsel %vm1080, %v1073, 0.0
        %v1083 = vlaneseq
        %v1084 = vshrl.u32 %v1083, 7
        %v1085 = vsub.s32 2, %v1084
        %v1086 = vrot.slane %v1026, %v1085
        %v1087 = vmul.f32 %v1081, %v1086
        %v1088 = vmul.f32 %v1082, %v1086
        %v1089 = vadd.f32 %v1068, %v1087
        %v1090 = vadd.f32 %v1069, %v1088
        %v1091 = vrot.slane %v1024, 7
        %v1092 = vrot.slane %v1025, 7
        %v1093 = vsel %vm272, %v1091, %v1092
        %v1094 = vsel %vm272, %v1092, %v1091
        %v1095 = vsel %vm279, %v1094, 0.0
        %v1096 = vsel %vm280, %v1093, 0.0
        %v1097 = vlaneseq
        %v1098 = vshrl.u32 %v1097, 7
        %v1099 = vsub.s32 3, %v1098
        %v1100 = vrot.slane %v1026, %v1099
        %v1101 = vmul.f32 %v1095, %v1100
        %v1102 = vmul.f32 %v1096, %v1100
        %v1103 = vadd.f32 %v1089, %v1101
        %v1104 = vadd.f32 %v1090, %v1102
        %v1105 = vlaneseq
        %v1106 = vshrl.u32 %v1105, 7
        %v1107 = vsub.s32 4, %v1106
        %v1108 = vrot.slane %v1026, %v1107
        %v1109 = vmul.f32 %v1024, %v1108
        %v1110 = vmul.f32 %v1025, %v1108
        %v1111 = vadd.f32 %v1103, %v1109
        %v1112 = vadd.f32 %v1104, %v1110
        %v1113 = vrot.slane %v1024, 1
        %v1114 = vrot.slane %v1025, 1
        %v1115 = vsel %vm455, %v1113, %v1114
        %v1116 = vsel %vm455, %v1114, %v1113
        %v1117 = vsel %vm462, %v1115, 0.0
        %v1118 = vsel %vm463, %v1116, 0.0
        %v1119 = vlaneseq
        %v1120 = vshrl.u32 %v1119, 7
        %v1121 = vsub.s32 5, %v1120
        %v1122 = vrot.slane %v1026, %v1121
        %v1123 = vmul.f32 %v1117, %v1122
        %v1124 = vmul.f32 %v1118, %v1122
        %v1125 = vadd.f32 %v1111, %v1123
        %v1126 = vadd.f32 %v1112, %v1124
        %v1127 = vrot.slane %v1024, 2
        %v1128 = vrot.slane %v1025, 2
        %vm1129 = vcmp.lt.s32.totalorder %v222, 6
        %v1130 = vsel %vm1129, %v1127, %v1128
        %v1131 = vsel %vm1129, %v1128, %v1127
        %vm1132 = vcmp.lt.s32.totalorder %v222, 14
        %vm1133 = vcmp.lt.s32.totalorder %v223, 14
        %v1134 = vsel %vm1132, 1, 0
        %v1135 = vsel %vm1133, 1, 0
        %vm1136 = vcmp.eq.s32.totalorder %v1134, 1
        %vm1137 = vcmp.eq.s32.totalorder %v1135, 1
        %v1138 = vsel %vm1136, %v1130, 0.0
        %v1139 = vsel %vm1137, %v1131, 0.0
        %v1140 = vlaneseq
        %v1141 = vshrl.u32 %v1140, 7
        %v1142 = vsub.s32 6, %v1141
        %v1143 = vrot.slane %v1026, %v1142
        %v1144 = vmul.f32 %v1138, %v1143
        %v1145 = vmul.f32 %v1139, %v1143
        %v1146 = vadd.f32 %v1125, %v1144
        %v1147 = vadd.f32 %v1126, %v1145
        %v1148 = vrot.slane %v1024, 3
        %v1149 = vrot.slane %v1025, 3
        %vm1150 = vcmp.lt.s32.totalorder %v222, 5
        %v1151 = vsel %vm1150, %v1148, %v1149
        %v1152 = vsel %vm1150, %v1149, %v1148
        %vm1153 = vcmp.lt.s32.totalorder %v222, 13
        %vm1154 = vcmp.lt.s32.totalorder %v223, 13
        %v1155 = vsel %vm1153, 1, 0
        %v1156 = vsel %vm1154, 1, 0
        %vm1157 = vcmp.eq.s32.totalorder %v1155, 1
        %vm1158 = vcmp.eq.s32.totalorder %v1156, 1
        %v1159 = vsel %vm1157, %v1151, 0.0
        %v1160 = vsel %vm1158, %v1152, 0.0
        %v1161 = vlaneseq
        %v1162 = vshrl.u32 %v1161, 7
        %v1163 = vsub.s32 7, %v1162
        %v1164 = vrot.slane %v1026, %v1163
        %v1165 = vmul.f32 %v1159, %v1164
        %v1166 = vmul.f32 %v1160, %v1164
        %v1167 = vadd.f32 %v1146, %v1165
        %v1168 = vadd.f32 %v1147, %v1166
        %vm1169 = vcmp.lt.s32.totalorder %v222, 12
        %vm1170 = vcmp.lt.s32.totalorder %v223, 12
        %v1171 = vsel %vm1169, 1, 0
        %v1172 = vsel %vm1170, 1, 0
        %vm1173 = vcmp.eq.s32.totalorder %v1171, 1
        %vm1174 = vcmp.eq.s32.totalorder %v1172, 1
        %v1175 = vsel %vm1173, %v1031, 0.0
        %v1176 = vsel %vm1174, %v1032, 0.0
        %v1177 = vlaneseq
        %v1178 = vshrl.u32 %v1177, 7
        %v1179 = vsub.s32 0, %v1178
        %v1180 = vrot.slane %v1027, %v1179
        %v1181 = vmul.f32 %v1175, %v1180
        %v1182 = vmul.f32 %v1176, %v1180
        %v1183 = vadd.f32 %v1167, %v1181
        %v1184 = vadd.f32 %v1168, %v1182
        %v1185 = vld [vmem:[#allocation5 + $0x158] sm:$0x1]
        %v1186 = vlaneseq
        %v1187 = vshrl.u32 %v1186, 7
        %v1188 = vsub.s32 0, %v1187
        %v1189 = vrot.slane %v1185, %v1188
        %v1190 = vadd.f32 %v1183, %v1189
        %v1191 = vadd.f32 %v1184, %v1189
        %v1192 = vld [vmem:[#allocation5 + $0x160] sm:$0xff]
        %v1193 = vld [vmem:[#allocation5 + $0x168] sm:$0xff]
        %v1194 = vld [vmem:[#allocation5 + $0x170] sm:$0xff]
        %v1195 = vld [vmem:[#allocation5 + $0x178] sm:$0xff]
        %v1196 = vld [vmem:[#allocation5 + $0x180] sm:$0xff]
        %v1197 = vld [vmem:[#allocation5 + $0x188] sm:$0xff]
        %v1198 = vld [vmem:[#allocation5 + $0x190] sm:$0xff]
        %v1199 = vld [vmem:[#allocation5 + $0x198] sm:$0xff]
        %v1200 = vld [vmem:[#allocation5 + $0x1a0] sm:$0x1]
        %v1201 = vlaneseq
        %v1202 = vshrl.u32 %v1201, 7
        %v1203 = vsub.s32 0, %v1202
        %v1204 = vrot.slane %v1200, %v1203
        %v1206 = vsel %vm986, %v1190, 0
        %v1209 = vsel %vm986, %v1191, 0
        %1211 = vmatprep.subr.mxu0 0.0
        %1212 = vmatpush1.msra.mxu0 0.0
        %1213 = vmatprep.subr.mxu0 0.0
        %1214 = vmatpush1.msra.mxu0 0.0
        %1215 = vmatprep.subr.mxu0 0.0
        %1216 = vmatpush1.msra.mxu0 0.0
        %1217 = vmatprep.subr.mxu0 0.0
        %1218 = vmatpush1.msra.mxu0 0.0
        %1219 = vmatprep.subr.mxu0 0.0
        %1220 = vmatpush1.msra.mxu0 0.0
        %1221 = vmatprep.subr.mxu0 0.0
        %1222 = vmatpush1.msra.mxu0 0.0
        %1223 = vmatprep.subr.mxu0 0.0
        %1224 = vmatpush1.msra.mxu0 0.0
        %1225 = vmatprep.subr.mxu0 0.0
        %1226 = vmatpush1.msra.mxu0 0.0
        %1227 = vmatprep.subr.mxu0 0.0
        %1228 = vmatpush1.msra.mxu0 %v1199
        %1229 = vmatprep.subr.mxu0 0.0
        %1230 = vmatpush1.msra.mxu0 %v1198
        %1231 = vmatprep.subr.mxu0 0.0
        %1232 = vmatpush1.msra.mxu0 %v1197
        %1233 = vmatprep.subr.mxu0 0.0
        %1234 = vmatpush1.msra.mxu0 %v1196
        %1235 = vmatprep.subr.mxu0 0.0
        %1236 = vmatpush1.msra.mxu0 %v1195
        %1237 = vmatprep.subr.mxu0 0.0
        %1238 = vmatpush1.msra.mxu0 %v1194
        %1239 = vmatprep.subr.mxu0 0.0
        %1240 = vmatpush1.msra.mxu0 %v1193
        %1241 = vmatprep.subr.mxu0 0.0
        %1242 = vmatpush1.msra.mxu0 %v1192
        %1243 = vmatprep.subr.mxu0 0.0
        %1244 = vmatpush2.msra.mxu0 0.0
        %1245 = vmatprep.subr.mxu0 0.0
        %1246 = vmatpush2.msra.mxu0 0.0
        %1247 = vmatprep.subr.mxu0 0.0
        %1248 = vmatpush2.msra.mxu0 0.0
        %1249 = vmatprep.subr.mxu0 0.0
        %1250 = vmatpush2.msra.mxu0 0.0
        %1251 = vmatprep.subr.mxu0 0.0
        %1252 = vmatpush2.msra.mxu0 0.0
        %1253 = vmatprep.subr.mxu0 0.0
        %1254 = vmatpush2.msra.mxu0 0.0
        %1255 = vmatprep.subr.mxu0 0.0
        %1256 = vmatpush2.msra.mxu0 0.0
        %1257 = vmatprep.subr.mxu0 0.0
        %1258 = vmatpush2.msra.mxu0 0.0
        %1259 = vmatprep.subr.mxu0 0.0
        %1260 = vmatpush2.msra.mxu0 0.0
        %1261 = vmatprep.subr.mxu0 0.0
        %1262 = vmatpush2.msra.mxu0 0.0
        %1263 = vmatprep.subr.mxu0 0.0
        %1264 = vmatpush2.msra.mxu0 0.0
        %1265 = vmatprep.subr.mxu0 0.0
        %1266 = vmatpush2.msra.mxu0 0.0
        %1267 = vmatprep.subr.mxu0 0.0
        %1268 = vmatpush2.msra.mxu0 0.0
        %1269 = vmatprep.subr.mxu0 0.0
        %1270 = vmatpush2.msra.mxu0 0.0
        %1271 = vmatprep.subr.mxu0 0.0
        %1272 = vmatpush2.msra.mxu0 0.0
        %1273 = vmatprep.subr.mxu0 0.0
        %1274 = vmatpush2.msra.mxu0 0.0
        %1275 = vmatprep.mubr.f32.mxu0 0.0
        %1276 = vmatmul.mubr.f32.gmra.mxu0 %v1206
        %v1277 = vpop.f32.mrf.mxu0
        %v1278 = vadd.f32 %v1204, %v1277
        %v1279 = vpop.f32.mrf.mxu0
        %1280 = vmatprep.mubr.f32.mxu0 0.0
        %1281 = vmatmul.mubr.f32.gmra.mxu0 %v1209
        %v1282 = vpop.f32.mrf.mxu0
        %v1283 = vadd.f32 %v1204, %v1282
        %v1284 = vpop.f32.mrf.mxu0
        %1285 = vdwg.mxu0
        %v1286 = vadd.f32 %v1278, %v576
        %v1287 = vadd.f32 %v1283, %v577
        %v1288 = vld [vmem:[#allocation5 + $0x20] sm:$0x1]
        %v1289 = vld [vmem:[#allocation5 + $0x28] sm:$0x1]
        %v1290 = vsel %vm226, %v1286, 0.0
        %1291 = vadd.xlane.f32.xlu0 %v1290
        %v1292 = vpop.xlane.xlu0 %1291
        %v1293 = vsel %vm226, %v1287, 0.0
        %1294 = vadd.xlane.f32.xlu0 %v1293
        %v1295 = vpop.xlane.xlu0 %1294
        %v1296 = vmul.f32 %v1292, %v233
        %v1297 = vmul.f32 %v1295, %v233
        %v1298 = vsub.f32 %v1286, %v1296
        %v1299 = vsub.f32 %v1287, %v1297
        %v1300 = vmul.f32 %v1298, %v1298
        %v1301 = vmul.f32 %v1299, %v1299
        %v1302 = vsel %vm226, %v1300, 0.0
        %1303 = vadd.xlane.f32.xlu0 %v1302
        %v1304 = vpop.xlane.xlu0 %1303
        %v1305 = vsel %vm226, %v1301, 0.0
        %1306 = vadd.xlane.f32.xlu0 %v1305
        %v1307 = vpop.xlane.xlu0 %1306
        %v1308 = vmul.f32 %v1304, %v233
        %v1309 = vmul.f32 %v1307, %v233
        %v1310 = vadd.f32 %v1308, 1e-05
        %v1311 = vadd.f32 %v1309, 1e-05
        %v1312 = vrsqrt.pop %v1310
        %v1313 = vrsqrt.pop %v1311
        %v1314 = vmul.f32 %v1298, %v1312
        %v1315 = vmul.f32 %v1299, %v1313
        %v1316 = vlaneseq
        %v1317 = vshrl.u32 %v1316, 7
        %v1318 = vsub.s32 0, %v1317
        %v1319 = vrot.slane %v1288, %v1318
        %v1320 = vmul.f32 %v1314, %v1319
        %v1321 = vmul.f32 %v1315, %v1319
        %v1322 = vlaneseq
        %v1323 = vshrl.u32 %v1322, 7
        %v1324 = vsub.s32 0, %v1323
        %v1325 = vrot.slane %v1289, %v1324
        %v1326 = vadd.f32 %v1320, %v1325
        %v1327 = vadd.f32 %v1321, %v1325
        %v1328 = vld [vmem:[#allocation5 + $0x1a8] sm:$0xff]
        %v1329 = vld [vmem:[#allocation5 + $0x1b0] sm:$0xff]
        %v1330 = vld [vmem:[#allocation5 + $0x1b8] sm:$0xff]
        %v1331 = vld [vmem:[#allocation5 + $0x1c0] sm:$0xff]
        %v1332 = vld [vmem:[#allocation5 + $0x1c8] sm:$0x1]
        %v1333 = vlaneseq
        %v1334 = vshrl.u32 %v1333, 7
        %v1335 = vsub.s32 0, %v1334
        %v1336 = vrot.slane %v1332, %v1335
        %v1338 = vsel %vm226, %v1326, 0
        %v1341 = vsel %vm226, %v1327, 0
        %1343 = vmatprep.subr.mxu0 0.0
        %1344 = vmatpush1.msra.mxu0 0.0
        %1345 = vmatprep.subr.mxu0 0.0
        %1346 = vmatpush1.msra.mxu0 0.0
        %1347 = vmatprep.subr.mxu0 0.0
        %1348 = vmatpush1.msra.mxu0 0.0
        %1349 = vmatprep.subr.mxu0 0.0
        %1350 = vmatpush1.msra.mxu0 0.0
        %1351 = vmatprep.subr.mxu0 0.0
        %1352 = vmatpush1.msra.mxu0 0.0
        %1353 = vmatprep.subr.mxu0 0.0
        %1354 = vmatpush1.msra.mxu0 0.0
        %1355 = vmatprep.subr.mxu0 0.0
        %1356 = vmatpush1.msra.mxu0 0.0
        %1357 = vmatprep.subr.mxu0 0.0
        %1358 = vmatpush1.msra.mxu0 0.0
        %1359 = vmatprep.subr.mxu0 0.0
        %1360 = vmatpush1.msra.mxu0 0.0
        %1361 = vmatprep.subr.mxu0 0.0
        %1362 = vmatpush1.msra.mxu0 0.0
        %1363 = vmatprep.subr.mxu0 0.0
        %1364 = vmatpush1.msra.mxu0 0.0
        %1365 = vmatprep.subr.mxu0 0.0
        %1366 = vmatpush1.msra.mxu0 0.0
        %1367 = vmatprep.subr.mxu0 0.0
        %1368 = vmatpush1.msra.mxu0 %v1331
        %1369 = vmatprep.subr.mxu0 0.0
        %1370 = vmatpush1.msra.mxu0 %v1330
        %1371 = vmatprep.subr.mxu0 0.0
        %1372 = vmatpush1.msra.mxu0 %v1329
        %1373 = vmatprep.subr.mxu0 0.0
        %1374 = vmatpush1.msra.mxu0 %v1328
        %1375 = vmatprep.subr.mxu0 0.0
        %1376 = vmatpush2.msra.mxu0 0.0
        %1377 = vmatprep.subr.mxu0 0.0
        %1378 = vmatpush2.msra.mxu0 0.0
        %1379 = vmatprep.subr.mxu0 0.0
        %1380 = vmatpush2.msra.mxu0 0.0
        %1381 = vmatprep.subr.mxu0 0.0
        %1382 = vmatpush2.msra.mxu0 0.0
        %1383 = vmatprep.subr.mxu0 0.0
        %1384 = vmatpush2.msra.mxu0 0.0
        %1385 = vmatprep.subr.mxu0 0.0
        %1386 = vmatpush2.msra.mxu0 0.0
        %1387 = vmatprep.subr.mxu0 0.0
        %1388 = vmatpush2.msra.mxu0 0.0
        %1389 = vmatprep.subr.mxu0 0.0
        %1390 = vmatpush2.msra.mxu0 0.0
        %1391 = vmatprep.subr.mxu0 0.0
        %1392 = vmatpush2.msra.mxu0 0.0
        %1393 = vmatprep.subr.mxu0 0.0
        %1394 = vmatpush2.msra.mxu0 0.0
        %1395 = vmatprep.subr.mxu0 0.0
        %1396 = vmatpush2.msra.mxu0 0.0
        %1397 = vmatprep.subr.mxu0 0.0
        %1398 = vmatpush2.msra.mxu0 0.0
        %1399 = vmatprep.subr.mxu0 0.0
        %1400 = vmatpush2.msra.mxu0 0.0
        %1401 = vmatprep.subr.mxu0 0.0
        %1402 = vmatpush2.msra.mxu0 0.0
        %1403 = vmatprep.subr.mxu0 0.0
        %1404 = vmatpush2.msra.mxu0 0.0
        %1405 = vmatprep.subr.mxu0 0.0
        %1406 = vmatpush2.msra.mxu0 0.0
        %1407 = vmatprep.mubr.f32.mxu0 0.0
        %1408 = vmatmul.mubr.f32.gmra.mxu0 %v1338
        %v1409 = vpop.f32.mrf.mxu0
        %v1410 = vadd.f32 %v1336, %v1409
        %v1411 = vpop.f32.mrf.mxu0
        %1412 = vmatprep.mubr.f32.mxu0 0.0
        %1413 = vmatmul.mubr.f32.gmra.mxu0 %v1341
        %v1414 = vpop.f32.mrf.mxu0
        %v1415 = vadd.f32 %v1336, %v1414
        %v1416 = vpop.f32.mrf.mxu0
        %1417 = vdwg.mxu0
        %v1418 = vld [vmem:[#allocation5 + $0x268] sm:$0xf]
        %vm1419 = vcmp.gt.f32.partialorder %v220, 0.5
        %v1420 = vsel %vm1419, -1e+30, 0.0
        %v1421 = vlaneseq
        %v1422 = vshrl.u32 %v1421, 7
        %v1423 = vsub.s32 0, %v1422
        %v1424 = vrot.slane %v1418, %v1423
        %v1425 = vmul.f32 %v1410, %v1424
        %v1426 = vmul.f32 %v1415, %v1424
        %v1427 = vlaneseq
        %v1428 = vshrl.u32 %v1427, 7
        %v1429 = vsub.s32 1, %v1428
        %v1430 = vrot.slane %v1418, %v1429
        %v1431 = vmul.f32 %v1410, %v1430
        %v1432 = vmul.f32 %v1415, %v1430
        %v1433 = vlaneseq
        %v1434 = vshrl.u32 %v1433, 7
        %v1435 = vsub.s32 2, %v1434
        %v1436 = vrot.slane %v1418, %v1435
        %v1437 = vmul.f32 %v1410, %v1436
        %v1438 = vmul.f32 %v1415, %v1436
        %v1439 = vlaneseq
        %v1440 = vshrl.u32 %v1439, 7
        %v1441 = vsub.s32 3, %v1440
        %v1442 = vrot.slane %v1418, %v1441
        %v1443 = vmul.f32 %v1410, %v1442
        %v1444 = vmul.f32 %v1415, %v1442
        %1447 = vrot.lane.b32.xlu0 %v1410, 96
        %v1448 = vpop.permute.xlu0 %1447
        %1449 = vrot.lane.b32.xlu0 %v1415, 96
        %v1450 = vpop.permute.xlu0 %1449
        %v1452 = vsel %vm226, %v1425, 0
        %v1455 = vsel %vm226, %v1426, 0
        %v1458 = vsel %vm226, %v1431, 0
        %v1461 = vsel %vm226, %v1432, 0
        %v1464 = vsel %vm226, %v1437, 0
        %v1467 = vsel %vm226, %v1438, 0
        %v1470 = vsel %vm226, %v1443, 0
        %v1473 = vsel %vm226, %v1444, 0
        %v1475 = vsel %vm226, %v1448, 0
        %v1477 = vsel %vm226, %v1450, 0
        %1479 = vmatprep.subr.mxu0 0.0
        %1480 = vmatpush1.xpose.msra.mxu0 0.0
        %1481 = vmatprep.subr.mxu0 0.0
        %1482 = vmatpush1.xpose.msra.mxu0 0.0
        %1483 = vmatprep.subr.mxu0 0.0
        %1484 = vmatpush1.xpose.msra.mxu0 0.0
        %1485 = vmatprep.subr.mxu0 0.0
        %1486 = vmatpush1.xpose.msra.mxu0 0.0
        %1487 = vmatprep.subr.mxu0 0.0
        %1488 = vmatpush1.xpose.msra.mxu0 0.0
        %1489 = vmatprep.subr.mxu0 0.0
        %1490 = vmatpush1.xpose.msra.mxu0 0.0
        %1491 = vmatprep.subr.mxu0 0.0
        %1492 = vmatpush1.xpose.msra.mxu0 0.0
        %1493 = vmatprep.subr.mxu0 0.0
        %1494 = vmatpush1.xpose.msra.mxu0 0.0
        %1495 = vmatprep.subr.mxu0 0.0
        %1496 = vmatpush1.xpose.msra.mxu0 0.0
        %1497 = vmatprep.subr.mxu0 0.0
        %1498 = vmatpush1.xpose.msra.mxu0 0.0
        %1499 = vmatprep.subr.mxu0 0.0
        %1500 = vmatpush1.xpose.msra.mxu0 0.0
        %1501 = vmatprep.subr.mxu0 0.0
        %1502 = vmatpush1.xpose.msra.mxu0 0.0
        %1503 = vmatprep.subr.mxu0 0.0
        %1504 = vmatpush1.xpose.msra.mxu0 0.0
        %1505 = vmatprep.subr.mxu0 0.0
        %1506 = vmatpush1.xpose.msra.mxu0 0.0
        %1507 = vmatprep.subr.mxu0 0.0
        %1508 = vmatpush1.xpose.msra.mxu0 %v1477
        %1509 = vmatprep.subr.mxu0 0.0
        %1510 = vmatpush1.xpose.msra.mxu0 %v1475
        %1511 = vmatprep.subr.mxu0 0.0
        %1512 = vmatpush2.xpose.msra.mxu0 0.0
        %1513 = vmatprep.subr.mxu0 0.0
        %1514 = vmatpush2.xpose.msra.mxu0 0.0
        %1515 = vmatprep.subr.mxu0 0.0
        %1516 = vmatpush2.xpose.msra.mxu0 0.0
        %1517 = vmatprep.subr.mxu0 0.0
        %1518 = vmatpush2.xpose.msra.mxu0 0.0
        %1519 = vmatprep.subr.mxu0 0.0
        %1520 = vmatpush2.xpose.msra.mxu0 0.0
        %1521 = vmatprep.subr.mxu0 0.0
        %1522 = vmatpush2.xpose.msra.mxu0 0.0
        %1523 = vmatprep.subr.mxu0 0.0
        %1524 = vmatpush2.xpose.msra.mxu0 0.0
        %1525 = vmatprep.subr.mxu0 0.0
        %1526 = vmatpush2.xpose.msra.mxu0 0.0
        %1527 = vmatprep.subr.mxu0 0.0
        %1528 = vmatpush2.xpose.msra.mxu0 0.0
        %1529 = vmatprep.subr.mxu0 0.0
        %1530 = vmatpush2.xpose.msra.mxu0 0.0
        %1531 = vmatprep.subr.mxu0 0.0
        %1532 = vmatpush2.xpose.msra.mxu0 0.0
        %1533 = vmatprep.subr.mxu0 0.0
        %1534 = vmatpush2.xpose.msra.mxu0 0.0
        %1535 = vmatprep.subr.mxu0 0.0
        %1536 = vmatpush2.xpose.msra.mxu0 0.0
        %1537 = vmatprep.subr.mxu0 0.0
        %1538 = vmatpush2.xpose.msra.mxu0 0.0
        %1539 = vmatprep.subr.mxu0 0.0
        %1540 = vmatpush2.xpose.msra.mxu0 0.0
        %1541 = vmatprep.subr.mxu0 0.0
        %1542 = vmatpush2.xpose.msra.mxu0 0.0
        %1543 = vmatprep.mubr.f32.mxu0 0.0
        %1544 = vmatmul.mubr.f32.gmra.mxu0 %v1452
        %v1545 = vpop.f32.mrf.mxu0
        %v1546 = vadd.f32 0.0, %v1545
        %v1547 = vpop.f32.mrf.mxu0
        %1548 = vmatprep.mubr.f32.mxu0 0.0
        %1549 = vmatmul.mubr.f32.gmra.mxu0 %v1455
        %v1550 = vpop.f32.mrf.mxu0
        %v1551 = vadd.f32 0.0, %v1550
        %v1552 = vpop.f32.mrf.mxu0
        %1553 = vmatprep.mubr.f32.mxu0 0.0
        %1554 = vmatmul.mubr.f32.gmra.mxu0 %v1458
        %v1555 = vpop.f32.mrf.mxu0
        %v1556 = vadd.f32 0.0, %v1555
        %v1557 = vpop.f32.mrf.mxu0
        %1558 = vmatprep.mubr.f32.mxu0 0.0
        %1559 = vmatmul.mubr.f32.gmra.mxu0 %v1461
        %v1560 = vpop.f32.mrf.mxu0
        %v1561 = vadd.f32 0.0, %v1560
        %v1562 = vpop.f32.mrf.mxu0
        %1563 = vmatprep.mubr.f32.mxu0 0.0
        %1564 = vmatmul.mubr.f32.gmra.mxu0 %v1464
        %v1565 = vpop.f32.mrf.mxu0
        %v1566 = vadd.f32 0.0, %v1565
        %v1567 = vpop.f32.mrf.mxu0
        %1568 = vmatprep.mubr.f32.mxu0 0.0
        %1569 = vmatmul.mubr.f32.gmra.mxu0 %v1467
        %v1570 = vpop.f32.mrf.mxu0
        %v1571 = vadd.f32 0.0, %v1570
        %v1572 = vpop.f32.mrf.mxu0
        %1573 = vmatprep.mubr.f32.mxu0 0.0
        %1574 = vmatmul.mubr.f32.gmra.mxu0 %v1470
        %v1575 = vpop.f32.mrf.mxu0
        %v1576 = vadd.f32 0.0, %v1575
        %v1577 = vpop.f32.mrf.mxu0
        %1578 = vmatprep.mubr.f32.mxu0 0.0
        %1579 = vmatmul.mubr.f32.gmra.mxu0 %v1473
        %v1580 = vpop.f32.mrf.mxu0
        %v1581 = vadd.f32 0.0, %v1580
        %v1582 = vpop.f32.mrf.mxu0
        %1583 = vdwg.mxu0
        %v1584 = vmul.f32 %v1546, 0.35355338
        %v1585 = vmul.f32 %v1551, 0.35355338
        %v1586 = vmul.f32 %v1556, 0.35355338
        %v1587 = vmul.f32 %v1561, 0.35355338
        %v1588 = vmul.f32 %v1566, 0.35355338
        %v1589 = vmul.f32 %v1571, 0.35355338
        %v1590 = vmul.f32 %v1576, 0.35355338
        %v1591 = vmul.f32 %v1581, 0.35355338
        %v1593 = vlaneseq
        %v1594 = vshrl.u32 %v1593, 7
        %v1595 = vsub.s32 0, %v1594
        %v1596 = vrot.slane %v1420, %v1595
        %v1598 = vadd.f32 %v1584, %v1596
        %v1599 = vadd.f32 %v1585, %v1596
        %v1600 = vadd.f32 %v1586, %v1596
        %v1601 = vadd.f32 %v1587, %v1596
        %v1602 = vadd.f32 %v1588, %v1596
        %v1603 = vadd.f32 %v1589, %v1596
        %v1604 = vadd.f32 %v1590, %v1596
        %v1605 = vadd.f32 %v1591, %v1596
        %vm1606 = vcmask 130048
        %v1607 = vsel %vm1606, %v1598, -inf
        %1608 = vmax.xlane.f32.xlu0 %v1607
        %v1609 = vpop.xlane.xlu0 %1608
        %v1610 = vsel %vm1606, %v1599, -inf
        %1611 = vmax.xlane.f32.xlu0 %v1610
        %v1612 = vpop.xlane.xlu0 %1611
        %v1613 = vsel %vm1606, %v1600, -inf
        %1614 = vmax.xlane.f32.xlu0 %v1613
        %v1615 = vpop.xlane.xlu0 %1614
        %v1616 = vsel %vm1606, %v1601, -inf
        %1617 = vmax.xlane.f32.xlu0 %v1616
        %v1618 = vpop.xlane.xlu0 %1617
        %v1619 = vsel %vm1606, %v1602, -inf
        %1620 = vmax.xlane.f32.xlu0 %v1619
        %v1621 = vpop.xlane.xlu0 %1620
        %v1622 = vsel %vm1606, %v1603, -inf
        %1623 = vmax.xlane.f32.xlu0 %v1622
        %v1624 = vpop.xlane.xlu0 %1623
        %v1625 = vsel %vm1606, %v1604, -inf
        %1626 = vmax.xlane.f32.xlu0 %v1625
        %v1627 = vpop.xlane.xlu0 %1626
        %v1628 = vsel %vm1606, %v1605, -inf
        %1629 = vmax.xlane.f32.xlu0 %v1628
        %v1630 = vpop.xlane.xlu0 %1629
        %v1631 = vsub.f32 %v1598, %v1609
        %v1632 = vsub.f32 %v1599, %v1612
        %v1633 = vsub.f32 %v1600, %v1615
        %v1634 = vsub.f32 %v1601, %v1618
        %v1635 = vsub.f32 %v1602, %v1621
        %v1636 = vsub.f32 %v1603, %v1624
        %v1637 = vsub.f32 %v1604, %v1627
        %v1638 = vsub.f32 %v1605, %v1630
        %v1639 = vmul.f32 %v1631, 1.442695
        %v1640 = vpow.pop %v1639
        %v1641 = vmul.f32 %v1632, 1.442695
        %v1642 = vpow.pop %v1641
        %v1643 = vmul.f32 %v1633, 1.442695
        %v1644 = vpow.pop %v1643
        %v1645 = vmul.f32 %v1634, 1.442695
        %v1646 = vpow.pop %v1645
        %v1647 = vmul.f32 %v1635, 1.442695
        %v1648 = vpow.pop %v1647
        %v1649 = vmul.f32 %v1636, 1.442695
        %v1650 = vpow.pop %v1649
        %v1651 = vmul.f32 %v1637, 1.442695
        %v1652 = vpow.pop %v1651
        %v1653 = vmul.f32 %v1638, 1.442695
        %v1654 = vpow.pop %v1653
        %v1655 = vsel %vm1606, %v1640, 0.0
        %1656 = vadd.xlane.f32.xlu0 %v1655
        %v1657 = vpop.xlane.xlu0 %1656
        %v1658 = vsel %vm1606, %v1642, 0.0
        %1659 = vadd.xlane.f32.xlu0 %v1658
        %v1660 = vpop.xlane.xlu0 %1659
        %v1661 = vsel %vm1606, %v1644, 0.0
        %1662 = vadd.xlane.f32.xlu0 %v1661
        %v1663 = vpop.xlane.xlu0 %1662
        %v1664 = vsel %vm1606, %v1646, 0.0
        %1665 = vadd.xlane.f32.xlu0 %v1664
        %v1666 = vpop.xlane.xlu0 %1665
        %v1667 = vsel %vm1606, %v1648, 0.0
        %1668 = vadd.xlane.f32.xlu0 %v1667
        %v1669 = vpop.xlane.xlu0 %1668
        %v1670 = vsel %vm1606, %v1650, 0.0
        %1671 = vadd.xlane.f32.xlu0 %v1670
        %v1672 = vpop.xlane.xlu0 %1671
        %v1673 = vsel %vm1606, %v1652, 0.0
        %1674 = vadd.xlane.f32.xlu0 %v1673
        %v1675 = vpop.xlane.xlu0 %1674
        %v1676 = vsel %vm1606, %v1654, 0.0
        %1677 = vadd.xlane.f32.xlu0 %v1676
        %v1678 = vpop.xlane.xlu0 %1677
        %v1679 = vrcp.pop %v1657
        %v1680 = vrcp.pop %v1660
        %v1681 = vrcp.pop %v1663
        %v1682 = vrcp.pop %v1666
        %v1683 = vrcp.pop %v1669
        %v1684 = vrcp.pop %v1672
        %v1685 = vrcp.pop %v1675
        %v1686 = vrcp.pop %v1678
        %v1687 = vmul.f32 %v1640, %v1679
        %v1688 = vmul.f32 %v1642, %v1680
        %v1689 = vmul.f32 %v1644, %v1681
        %v1690 = vmul.f32 %v1646, %v1682
        %v1691 = vmul.f32 %v1648, %v1683
        %v1692 = vmul.f32 %v1650, %v1684
        %v1693 = vmul.f32 %v1652, %v1685
        %v1694 = vmul.f32 %v1654, %v1686
        %1695 = vrot.lane.b32.xlu0 %v1410, 64
        %v1696 = vpop.permute.xlu0 %1695
        %1697 = vrot.lane.b32.xlu0 %v1415, 64
        %v1698 = vpop.permute.xlu0 %1697
        %v1702 = vsel %vm1606, %v1687, 0
        %v1705 = vsel %vm1606, %v1688, 0
        %v1708 = vsel %vm1606, %v1689, 0
        %v1711 = vsel %vm1606, %v1690, 0
        %v1714 = vsel %vm1606, %v1691, 0
        %v1717 = vsel %vm1606, %v1692, 0
        %v1720 = vsel %vm1606, %v1693, 0
        %v1723 = vsel %vm1606, %v1694, 0
        %1725 = vmatprep.subr.mxu0 0.0
        %1726 = vmatpush1.msra.mxu0 0.0
        %1727 = vmatprep.subr.mxu0 0.0
        %1728 = vmatpush1.msra.mxu0 0.0
        %1729 = vmatprep.subr.mxu0 0.0
        %1730 = vmatpush1.msra.mxu0 0.0
        %1731 = vmatprep.subr.mxu0 0.0
        %1732 = vmatpush1.msra.mxu0 0.0
        %1733 = vmatprep.subr.mxu0 0.0
        %1734 = vmatpush1.msra.mxu0 0.0
        %1735 = vmatprep.subr.mxu0 0.0
        %1736 = vmatpush1.msra.mxu0 0.0
        %1737 = vmatprep.subr.mxu0 0.0
        %1738 = vmatpush1.msra.mxu0 0.0
        %1739 = vmatprep.subr.mxu0 0.0
        %1740 = vmatpush1.msra.mxu0 0.0
        %1741 = vmatprep.subr.mxu0 0.0
        %1742 = vmatpush1.msra.mxu0 0.0
        %1743 = vmatprep.subr.mxu0 0.0
        %1744 = vmatpush1.msra.mxu0 0.0
        %1745 = vmatprep.subr.mxu0 0.0
        %1746 = vmatpush1.msra.mxu0 0.0
        %1747 = vmatprep.subr.mxu0 0.0
        %1748 = vmatpush1.msra.mxu0 0.0
        %1749 = vmatprep.subr.mxu0 0.0
        %1750 = vmatpush1.msra.mxu0 0.0
        %1751 = vmatprep.subr.mxu0 0.0
        %1752 = vmatpush1.msra.mxu0 0.0
        %1753 = vmatprep.subr.mxu0 0.0
        %1754 = vmatpush1.msra.mxu0 %v1698
        %1755 = vmatprep.subr.mxu0 0.0
        %1756 = vmatpush1.msra.mxu0 %v1696
        %1757 = vmatprep.subr.mxu0 0.0
        %1758 = vmatpush2.msra.mxu0 0.0
        %1759 = vmatprep.subr.mxu0 0.0
        %1760 = vmatpush2.msra.mxu0 0.0
        %1761 = vmatprep.subr.mxu0 0.0
        %1762 = vmatpush2.msra.mxu0 0.0
        %1763 = vmatprep.subr.mxu0 0.0
        %1764 = vmatpush2.msra.mxu0 0.0
        %1765 = vmatprep.subr.mxu0 0.0
        %1766 = vmatpush2.msra.mxu0 0.0
        %1767 = vmatprep.subr.mxu0 0.0
        %1768 = vmatpush2.msra.mxu0 0.0
        %1769 = vmatprep.subr.mxu0 0.0
        %1770 = vmatpush2.msra.mxu0 0.0
        %1771 = vmatprep.subr.mxu0 0.0
        %1772 = vmatpush2.msra.mxu0 0.0
        %1773 = vmatprep.subr.mxu0 0.0
        %1774 = vmatpush2.msra.mxu0 0.0
        %1775 = vmatprep.subr.mxu0 0.0
        %1776 = vmatpush2.msra.mxu0 0.0
        %1777 = vmatprep.subr.mxu0 0.0
        %1778 = vmatpush2.msra.mxu0 0.0
        %1779 = vmatprep.subr.mxu0 0.0
        %1780 = vmatpush2.msra.mxu0 0.0
        %1781 = vmatprep.subr.mxu0 0.0
        %1782 = vmatpush2.msra.mxu0 0.0
        %1783 = vmatprep.subr.mxu0 0.0
        %1784 = vmatpush2.msra.mxu0 0.0
        %1785 = vmatprep.subr.mxu0 0.0
        %1786 = vmatpush2.msra.mxu0 0.0
        %1787 = vmatprep.subr.mxu0 0.0
        %1788 = vmatpush2.msra.mxu0 0.0
        %1789 = vmatprep.mubr.f32.mxu0 0.0
        %1790 = vmatmul.mubr.f32.gmra.mxu0 %v1702
        %v1791 = vpop.f32.mrf.mxu0
        %v1792 = vadd.f32 0.0, %v1791
        %v1793 = vpop.f32.mrf.mxu0
        %1794 = vmatprep.mubr.f32.mxu0 0.0
        %1795 = vmatmul.mubr.f32.gmra.mxu0 %v1705
        %v1796 = vpop.f32.mrf.mxu0
        %v1797 = vadd.f32 0.0, %v1796
        %v1798 = vpop.f32.mrf.mxu0
        %1799 = vmatprep.mubr.f32.mxu0 0.0
        %1800 = vmatmul.mubr.f32.gmra.mxu0 %v1708
        %v1801 = vpop.f32.mrf.mxu0
        %v1802 = vadd.f32 0.0, %v1801
        %v1803 = vpop.f32.mrf.mxu0
        %1804 = vmatprep.mubr.f32.mxu0 0.0
        %1805 = vmatmul.mubr.f32.gmra.mxu0 %v1711
        %v1806 = vpop.f32.mrf.mxu0
        %v1807 = vadd.f32 0.0, %v1806
        %v1808 = vpop.f32.mrf.mxu0
        %1809 = vmatprep.mubr.f32.mxu0 0.0
        %1810 = vmatmul.mubr.f32.gmra.mxu0 %v1714
        %v1811 = vpop.f32.mrf.mxu0
        %v1812 = vadd.f32 0.0, %v1811
        %v1813 = vpop.f32.mrf.mxu0
        %1814 = vmatprep.mubr.f32.mxu0 0.0
        %1815 = vmatmul.mubr.f32.gmra.mxu0 %v1717
        %v1816 = vpop.f32.mrf.mxu0
        %v1817 = vadd.f32 0.0, %v1816
        %v1818 = vpop.f32.mrf.mxu0
        %1819 = vmatprep.mubr.f32.mxu0 0.0
        %1820 = vmatmul.mubr.f32.gmra.mxu0 %v1720
        %v1821 = vpop.f32.mrf.mxu0
        %v1822 = vadd.f32 0.0, %v1821
        %v1823 = vpop.f32.mrf.mxu0
        %1824 = vmatprep.mubr.f32.mxu0 0.0
        %1825 = vmatmul.mubr.f32.gmra.mxu0 %v1723
        %v1826 = vpop.f32.mrf.mxu0
        %v1827 = vadd.f32 0.0, %v1826
        %v1828 = vpop.f32.mrf.mxu0
        %1829 = vdwg.mxu0
        %v1830 = vmul.f32 %v1792, %v1424
        %v1831 = vmul.f32 %v1797, %v1424
        %v1832 = vadd.f32 %v1830, 0.0
        %v1833 = vadd.f32 %v1831, 0.0
        %v1834 = vmul.f32 %v1802, %v1430
        %v1835 = vmul.f32 %v1807, %v1430
        %v1836 = vadd.f32 %v1832, %v1834
        %v1837 = vadd.f32 %v1833, %v1835
        %v1838 = vmul.f32 %v1812, %v1436
        %v1839 = vmul.f32 %v1817, %v1436
        %v1840 = vadd.f32 %v1836, %v1838
        %v1841 = vadd.f32 %v1837, %v1839
        %v1842 = vmul.f32 %v1822, %v1442
        %v1843 = vmul.f32 %v1827, %v1442
        %v1844 = vadd.f32 %v1840, %v1842
        %v1845 = vadd.f32 %v1841, %v1843
        %v1846 = vld [vmem:[#allocation5 + $0x1d0] sm:$0xff]
        %v1847 = vld [vmem:[#allocation5 + $0x1d8] sm:$0xff]
        %v1848 = vld [vmem:[#allocation5 + $0x1e0] sm:$0xff]
        %v1849 = vld [vmem:[#allocation5 + $0x1e8] sm:$0xff]
        %v1850 = vld [vmem:[#allocation5 + $0x1f0] sm:$0x1]
        %v1851 = vlaneseq
        %v1852 = vshrl.u32 %v1851, 7
        %v1853 = vsub.s32 0, %v1852
        %v1854 = vrot.slane %v1850, %v1853
        %v1856 = vsel %vm226, %v1844, 0
        %v1859 = vsel %vm226, %v1845, 0
        %1861 = vmatprep.subr.mxu0 0.0
        %1862 = vmatpush1.msra.mxu0 0.0
        %1863 = vmatprep.subr.mxu0 0.0
        %1864 = vmatpush1.msra.mxu0 0.0
        %1865 = vmatprep.subr.mxu0 0.0
        %1866 = vmatpush1.msra.mxu0 0.0
        %1867 = vmatprep.subr.mxu0 0.0
        %1868 = vmatpush1.msra.mxu0 0.0
        %1869 = vmatprep.subr.mxu0 0.0
        %1870 = vmatpush1.msra.mxu0 0.0
        %1871 = vmatprep.subr.mxu0 0.0
        %1872 = vmatpush1.msra.mxu0 0.0
        %1873 = vmatprep.subr.mxu0 0.0
        %1874 = vmatpush1.msra.mxu0 0.0
        %1875 = vmatprep.subr.mxu0 0.0
        %1876 = vmatpush1.msra.mxu0 0.0
        %1877 = vmatprep.subr.mxu0 0.0
        %1878 = vmatpush1.msra.mxu0 0.0
        %1879 = vmatprep.subr.mxu0 0.0
        %1880 = vmatpush1.msra.mxu0 0.0
        %1881 = vmatprep.subr.mxu0 0.0
        %1882 = vmatpush1.msra.mxu0 0.0
        %1883 = vmatprep.subr.mxu0 0.0
        %1884 = vmatpush1.msra.mxu0 0.0
        %1885 = vmatprep.subr.mxu0 0.0
        %1886 = vmatpush1.msra.mxu0 %v1849
        %1887 = vmatprep.subr.mxu0 0.0
        %1888 = vmatpush1.msra.mxu0 %v1848
        %1889 = vmatprep.subr.mxu0 0.0
        %1890 = vmatpush1.msra.mxu0 %v1847
        %1891 = vmatprep.subr.mxu0 0.0
        %1892 = vmatpush1.msra.mxu0 %v1846
        %1893 = vmatprep.subr.mxu0 0.0
        %1894 = vmatpush2.msra.mxu0 0.0
        %1895 = vmatprep.subr.mxu0 0.0
        %1896 = vmatpush2.msra.mxu0 0.0
        %1897 = vmatprep.subr.mxu0 0.0
        %1898 = vmatpush2.msra.mxu0 0.0
        %1899 = vmatprep.subr.mxu0 0.0
        %1900 = vmatpush2.msra.mxu0 0.0
        %1901 = vmatprep.subr.mxu0 0.0
        %1902 = vmatpush2.msra.mxu0 0.0
        %1903 = vmatprep.subr.mxu0 0.0
        %1904 = vmatpush2.msra.mxu0 0.0
        %1905 = vmatprep.subr.mxu0 0.0
        %1906 = vmatpush2.msra.mxu0 0.0
        %1907 = vmatprep.subr.mxu0 0.0
        %1908 = vmatpush2.msra.mxu0 0.0
        %1909 = vmatprep.subr.mxu0 0.0
        %1910 = vmatpush2.msra.mxu0 0.0
        %1911 = vmatprep.subr.mxu0 0.0
        %1912 = vmatpush2.msra.mxu0 0.0
        %1913 = vmatprep.subr.mxu0 0.0
        %1914 = vmatpush2.msra.mxu0 0.0
        %1915 = vmatprep.subr.mxu0 0.0
        %1916 = vmatpush2.msra.mxu0 0.0
        %1917 = vmatprep.subr.mxu0 0.0
        %1918 = vmatpush2.msra.mxu0 0.0
        %1919 = vmatprep.subr.mxu0 0.0
        %1920 = vmatpush2.msra.mxu0 0.0
        %1921 = vmatprep.subr.mxu0 0.0
        %1922 = vmatpush2.msra.mxu0 0.0
        %1923 = vmatprep.subr.mxu0 0.0
        %1924 = vmatpush2.msra.mxu0 0.0
        %1925 = vmatprep.mubr.f32.mxu0 0.0
        %1926 = vmatmul.mubr.f32.gmra.mxu0 %v1856
        %v1927 = vpop.f32.mrf.mxu0
        %v1928 = vadd.f32 %v1854, %v1927
        %v1929 = vpop.f32.mrf.mxu0
        %1930 = vmatprep.mubr.f32.mxu0 0.0
        %1931 = vmatmul.mubr.f32.gmra.mxu0 %v1859
        %v1932 = vpop.f32.mrf.mxu0
        %v1933 = vadd.f32 %v1854, %v1932
        %v1934 = vpop.f32.mrf.mxu0
        %1935 = vdwg.mxu0
        %v1936 = vadd.f32 %v1326, %v1928
        %v1937 = vadd.f32 %v1327, %v1933
        %v1938 = vld [vmem:[#allocation5 + $0x30] sm:$0x1]
        %v1939 = vld [vmem:[#allocation5 + $0x38] sm:$0x1]
        %v1940 = vsel %vm226, %v1936, 0.0
        %1941 = vadd.xlane.f32.xlu0 %v1940
        %v1942 = vpop.xlane.xlu0 %1941
        %v1943 = vsel %vm226, %v1937, 0.0
        %1944 = vadd.xlane.f32.xlu0 %v1943
        %v1945 = vpop.xlane.xlu0 %1944
        %v1946 = vmul.f32 %v1942, %v233
        %v1947 = vmul.f32 %v1945, %v233
        %v1948 = vsub.f32 %v1936, %v1946
        %v1949 = vsub.f32 %v1937, %v1947
        %v1950 = vmul.f32 %v1948, %v1948
        %v1951 = vmul.f32 %v1949, %v1949
        %v1952 = vsel %vm226, %v1950, 0.0
        %1953 = vadd.xlane.f32.xlu0 %v1952
        %v1954 = vpop.xlane.xlu0 %1953
        %v1955 = vsel %vm226, %v1951, 0.0
        %1956 = vadd.xlane.f32.xlu0 %v1955
        %v1957 = vpop.xlane.xlu0 %1956
        %v1958 = vmul.f32 %v1954, %v233
        %v1959 = vmul.f32 %v1957, %v233
        %v1960 = vadd.f32 %v1958, 1e-05
        %v1961 = vadd.f32 %v1959, 1e-05
        %v1962 = vrsqrt.pop %v1960
        %v1963 = vrsqrt.pop %v1961
        %v1964 = vmul.f32 %v1948, %v1962
        %v1965 = vmul.f32 %v1949, %v1963
        %v1966 = vlaneseq
        %v1967 = vshrl.u32 %v1966, 7
        %v1968 = vsub.s32 0, %v1967
        %v1969 = vrot.slane %v1938, %v1968
        %v1970 = vmul.f32 %v1964, %v1969
        %v1971 = vmul.f32 %v1965, %v1969
        %v1972 = vlaneseq
        %v1973 = vshrl.u32 %v1972, 7
        %v1974 = vsub.s32 0, %v1973
        %v1975 = vrot.slane %v1939, %v1974
        %v1976 = vadd.f32 %v1970, %v1975
        %v1977 = vadd.f32 %v1971, %v1975
        %v1978 = vld [vmem:[#allocation5 + $0x1f8] sm:$0xff]
        %v1979 = vld [vmem:[#allocation5 + $0x200] sm:$0xff]
        %v1980 = vld [vmem:[#allocation5 + $0x208] sm:$0xff]
        %v1981 = vld [vmem:[#allocation5 + $0x210] sm:$0xff]
        %v1982 = vld [vmem:[#allocation5 + $0x218] sm:$0x1]
        %v1983 = vlaneseq
        %v1984 = vshrl.u32 %v1983, 7
        %v1985 = vsub.s32 0, %v1984
        %v1986 = vrot.slane %v1982, %v1985
        %v1988 = vsel %vm226, %v1976, 0
        %v1991 = vsel %vm226, %v1977, 0
        %1993 = vmatprep.subr.mxu0 0.0
        %1994 = vmatpush1.msra.mxu0 0.0
        %1995 = vmatprep.subr.mxu0 0.0
        %1996 = vmatpush1.msra.mxu0 0.0
        %1997 = vmatprep.subr.mxu0 0.0
        %1998 = vmatpush1.msra.mxu0 0.0
        %1999 = vmatprep.subr.mxu0 0.0
        %2000 = vmatpush1.msra.mxu0 0.0
        %2001 = vmatprep.subr.mxu0 0.0
        %2002 = vmatpush1.msra.mxu0 0.0
        %2003 = vmatprep.subr.mxu0 0.0
        %2004 = vmatpush1.msra.mxu0 0.0
        %2005 = vmatprep.subr.mxu0 0.0
        %2006 = vmatpush1.msra.mxu0 0.0
        %2007 = vmatprep.subr.mxu0 0.0
        %2008 = vmatpush1.msra.mxu0 0.0
        %2009 = vmatprep.subr.mxu0 0.0
        %2010 = vmatpush1.msra.mxu0 0.0
        %2011 = vmatprep.subr.mxu0 0.0
        %2012 = vmatpush1.msra.mxu0 0.0
        %2013 = vmatprep.subr.mxu0 0.0
        %2014 = vmatpush1.msra.mxu0 0.0
        %2015 = vmatprep.subr.mxu0 0.0
        %2016 = vmatpush1.msra.mxu0 0.0
        %2017 = vmatprep.subr.mxu0 0.0
        %2018 = vmatpush1.msra.mxu0 %v1981
        %2019 = vmatprep.subr.mxu0 0.0
        %2020 = vmatpush1.msra.mxu0 %v1980
        %2021 = vmatprep.subr.mxu0 0.0
        %2022 = vmatpush1.msra.mxu0 %v1979
        %2023 = vmatprep.subr.mxu0 0.0
        %2024 = vmatpush1.msra.mxu0 %v1978
        %2025 = vmatprep.subr.mxu0 0.0
        %2026 = vmatpush2.msra.mxu0 0.0
        %2027 = vmatprep.subr.mxu0 0.0
        %2028 = vmatpush2.msra.mxu0 0.0
        %2029 = vmatprep.subr.mxu0 0.0
        %2030 = vmatpush2.msra.mxu0 0.0
        %2031 = vmatprep.subr.mxu0 0.0
        %2032 = vmatpush2.msra.mxu0 0.0
        %2033 = vmatprep.subr.mxu0 0.0
        %2034 = vmatpush2.msra.mxu0 0.0
        %2035 = vmatprep.subr.mxu0 0.0
        %2036 = vmatpush2.msra.mxu0 0.0
        %2037 = vmatprep.subr.mxu0 0.0
        %2038 = vmatpush2.msra.mxu0 0.0
        %2039 = vmatprep.subr.mxu0 0.0
        %2040 = vmatpush2.msra.mxu0 0.0
        %2041 = vmatprep.subr.mxu0 0.0
        %2042 = vmatpush2.msra.mxu0 0.0
        %2043 = vmatprep.subr.mxu0 0.0
        %2044 = vmatpush2.msra.mxu0 0.0
        %2045 = vmatprep.subr.mxu0 0.0
        %2046 = vmatpush2.msra.mxu0 0.0
        %2047 = vmatprep.subr.mxu0 0.0
        %2048 = vmatpush2.msra.mxu0 0.0
        %2049 = vmatprep.subr.mxu0 0.0
        %2050 = vmatpush2.msra.mxu0 0.0
        %2051 = vmatprep.subr.mxu0 0.0
        %2052 = vmatpush2.msra.mxu0 0.0
        %2053 = vmatprep.subr.mxu0 0.0
        %2054 = vmatpush2.msra.mxu0 0.0
        %2055 = vmatprep.subr.mxu0 0.0
        %2056 = vmatpush2.msra.mxu0 0.0
        %2057 = vmatprep.mubr.f32.mxu0 0.0
        %2058 = vmatmul.mubr.f32.gmra.mxu0 %v1988
        %v2059 = vpop.f32.mrf.mxu0
        %v2060 = vadd.f32 %v1986, %v2059
        %v2061 = vpop.f32.mrf.mxu0
        %2062 = vmatprep.mubr.f32.mxu0 0.0
        %2063 = vmatmul.mubr.f32.gmra.mxu0 %v1991
        %v2064 = vpop.f32.mrf.mxu0
        %v2065 = vadd.f32 %v1986, %v2064
        %v2066 = vpop.f32.mrf.mxu0
        %2067 = vdwg.mxu0
        %v2068 = vxor.u32 %v2060, 2147483648
        %v2069 = vxor.u32 %v2065, 2147483648
        %v2070 = vmul.f32 %v2068, 1.442695
        %v2071 = vpow.pop %v2070
        %v2072 = vmul.f32 %v2069, 1.442695
        %v2073 = vpow.pop %v2072
        %v2074 = vadd.f32 %v2071, 1.0
        %v2075 = vadd.f32 %v2073, 1.0
        %v2076 = vrcp.pop %v2074
        %v2077 = vmul.f32 1.0, %v2076
        %v2078 = vrcp.pop %v2075
        %v2079 = vmul.f32 1.0, %v2078
        %v2080 = vmul.f32 %v2060, %v2077
        %v2081 = vmul.f32 %v2065, %v2079
        %v2082 = vld [vmem:[#allocation5 + $0x220] sm:$0xff]
        %v2083 = vld [vmem:[#allocation5 + $0x228] sm:$0xff]
        %v2084 = vld [vmem:[#allocation5 + $0x230] sm:$0xff]
        %v2085 = vld [vmem:[#allocation5 + $0x238] sm:$0xff]
        %v2086 = vld [vmem:[#allocation5 + $0x240] sm:$0xff]
        %v2087 = vld [vmem:[#allocation5 + $0x248] sm:$0xff]
        %v2088 = vld [vmem:[#allocation5 + $0x250] sm:$0xff]
        %v2089 = vld [vmem:[#allocation5 + $0x258] sm:$0xff]
        %v2090 = vld [vmem:[#allocation5 + $0x260] sm:$0x1]
        %v2091 = vlaneseq
        %v2092 = vshrl.u32 %v2091, 7
        %v2093 = vsub.s32 0, %v2092
        %v2094 = vrot.slane %v2090, %v2093
        %v2096 = vsel %vm986, %v2080, 0
        %v2099 = vsel %vm986, %v2081, 0
        %2101 = vmatprep.subr.mxu0 0.0
        %2102 = vmatpush1.msra.mxu0 0.0
        %2103 = vmatprep.subr.mxu0 0.0
        %2104 = vmatpush1.msra.mxu0 0.0
        %2105 = vmatprep.subr.mxu0 0.0
        %2106 = vmatpush1.msra.mxu0 0.0
        %2107 = vmatprep.subr.mxu0 0.0
        %2108 = vmatpush1.msra.mxu0 0.0
        %2109 = vmatprep.subr.mxu0 0.0
        %2110 = vmatpush1.msra.mxu0 0.0
        %2111 = vmatprep.subr.mxu0 0.0
        %2112 = vmatpush1.msra.mxu0 0.0
        %2113 = vmatprep.subr.mxu0 0.0
        %2114 = vmatpush1.msra.mxu0 0.0
        %2115 = vmatprep.subr.mxu0 0.0
        %2116 = vmatpush1.msra.mxu0 0.0
        %2117 = vmatprep.subr.mxu0 0.0
        %2118 = vmatpush1.msra.mxu0 %v2089
        %2119 = vmatprep.subr.mxu0 0.0
        %2120 = vmatpush1.msra.mxu0 %v2088
        %2121 = vmatprep.subr.mxu0 0.0
        %2122 = vmatpush1.msra.mxu0 %v2087
        %2123 = vmatprep.subr.mxu0 0.0
        %2124 = vmatpush1.msra.mxu0 %v2086
        %2125 = vmatprep.subr.mxu0 0.0
        %2126 = vmatpush1.msra.mxu0 %v2085
        %2127 = vmatprep.subr.mxu0 0.0
        %2128 = vmatpush1.msra.mxu0 %v2084
        %2129 = vmatprep.subr.mxu0 0.0
        %2130 = vmatpush1.msra.mxu0 %v2083
        %2131 = vmatprep.subr.mxu0 0.0
        %2132 = vmatpush1.msra.mxu0 %v2082
        %2133 = vmatprep.subr.mxu0 0.0
        %2134 = vmatpush2.msra.mxu0 0.0
        %2135 = vmatprep.subr.mxu0 0.0
        %2136 = vmatpush2.msra.mxu0 0.0
        %2137 = vmatprep.subr.mxu0 0.0
        %2138 = vmatpush2.msra.mxu0 0.0
        %2139 = vmatprep.subr.mxu0 0.0
        %2140 = vmatpush2.msra.mxu0 0.0
        %2141 = vmatprep.subr.mxu0 0.0
        %2142 = vmatpush2.msra.mxu0 0.0
        %2143 = vmatprep.subr.mxu0 0.0
        %2144 = vmatpush2.msra.mxu0 0.0
        %2145 = vmatprep.subr.mxu0 0.0
        %2146 = vmatpush2.msra.mxu0 0.0
        %2147 = vmatprep.subr.mxu0 0.0
        %2148 = vmatpush2.msra.mxu0 0.0
        %2149 = vmatprep.subr.mxu0 0.0
        %2150 = vmatpush2.msra.mxu0 0.0
        %2151 = vmatprep.subr.mxu0 0.0
        %2152 = vmatpush2.msra.mxu0 0.0
        %2153 = vmatprep.subr.mxu0 0.0
        %2154 = vmatpush2.msra.mxu0 0.0
        %2155 = vmatprep.subr.mxu0 0.0
        %2156 = vmatpush2.msra.mxu0 0.0
        %2157 = vmatprep.subr.mxu0 0.0
        %2158 = vmatpush2.msra.mxu0 0.0
        %2159 = vmatprep.subr.mxu0 0.0
        %2160 = vmatpush2.msra.mxu0 0.0
        %2161 = vmatprep.subr.mxu0 0.0
        %2162 = vmatpush2.msra.mxu0 0.0
        %2163 = vmatprep.subr.mxu0 0.0
        %2164 = vmatpush2.msra.mxu0 0.0
        %2165 = vmatprep.mubr.f32.mxu0 0.0
        %2166 = vmatmul.mubr.f32.gmra.mxu0 %v2096
        %v2167 = vpop.f32.mrf.mxu0
        %v2168 = vadd.f32 %v2094, %v2167
        %v2169 = vpop.f32.mrf.mxu0
        %2170 = vmatprep.mubr.f32.mxu0 0.0
        %2171 = vmatmul.mubr.f32.gmra.mxu0 %v2099
        %v2172 = vpop.f32.mrf.mxu0
        %v2173 = vadd.f32 %v2094, %v2172
        %v2174 = vpop.f32.mrf.mxu0
        %2175 = vdwg.mxu0
        %v2176 = vadd.f32 %v2168, %v1936
        %v2177 = vadd.f32 %v2173, %v1937
        %2178 = vst.msk [vmem:[%s214] sm:$0xff] %vm226, %v2176
        %2179 = vst.msk [vmem:[%s214 + $0x8] sm:$0xff] %vm226, %v2177
        %s2180 = sand.u32 %s102, 1
        %s2181 = scalar_lea.sflag [#allocation4], %s2180
        %s2182 = sand.u32 %s102, 1
        %s2183 = smul.addr %s2182, 16
        %s2184 = scalar_lea.vmem [#allocation7], %s2183
        // Predicated region
        $region41: #{run.1} parent=31 // pred_check
          %p2185 = pneg %p112
        $region42: #{run.1} parent=31 // pred_check_branch
          %2187 = sbr.rel (%p2185) target = $region44
        $region43: #{run.1} parent=31 // pred_region
          %s2189 = ssub.s32 256, 256
          %2190 = vsyncadd %s2181, %s2189
          %s2191 = smul.addr %s21, 2
          %s2192 = smul.addr %s2191, 128
          %s2193 = scalar_lea.hbm %s3, %s2192
          %s2194 = sshll.u32 %s2184, 4
          %s2195 = int_to_ptr.vmem [resolvable:$true] %s2194
          %2200 = dma.vmem_to_hbm [thread:$0]  %s2195, 256, %s2193, %s2181, 128, 128, 8
        $region44: #{run.1} parent=31 // pred_fallthru
          _
      $region32: #{run.1} parent=5 // pred_fallthru
        _
      %p2201 = scmp.le.s32.totalorder 2, %s16
      // Predicated region
      $region45: #{run.1} parent=5 // pred_check
        %p2202 = pneg %p2201
      $region46: #{run.1} parent=5 // pred_check_branch
        %2204 = sbr.rel (%p2202) target = $region48
      $region47: #{run.1} parent=5 // pred_region
        %s2205 = ssub.s32 %s16, 2
        // Predicated region
        $region49: #{run.1} parent=47 // pred_check
          %p2206 = pneg %p118
        $region50: #{run.1} parent=47 // pred_check_branch
          %2208 = sbr.rel (%p2206) target = $region52
        $region51: #{run.1} parent=47 // pred_region
          %s2209 = sand.u32 %s103, 1
          %s2210 = scalar_lea.sflag [#allocation4], %s2209
          %s2211 = sand.u32 %s103, 1
          %s2212 = smul.addr %s2211, 16
          %s2213 = scalar_lea.vmem [#allocation7], %s2212
          %2214 = dma.done %s2210, 256
        $region52: #{run.1} parent=47 // pred_fallthru
          _
      $region48: #{run.1} parent=5 // pred_fallthru
        _
    $region6: #{run.1} parent=1 // loop_footer
      %s20 = sadd.s32 1, %s16
    $region7: #{run.1} parent=1 // loop_footer_branch
      %15 = sbr.rel target = $region3
    $region8: #{run.1} parent=1 // loop_exit
      _
    %2215 = vsyncpa [#allocation3], 1
    %s2216 = scalar_lea.sflag [#allocation3], 1
    %2217 = vsyncpa %s2216, 1
    %2218 = vsyncpa [#allocation6], 1
    %2219 = vsyncpa [#allocation4], 1
    %s2220 = scalar_lea.sflag [#allocation4], 1
    %2221 = vsyncpa %s2220, 1

</llo_original>
